<compile_context>
chip_gen: v5e
topology: v5e:2x2
jax: 0.10.0
libtpu: 0.0.40
codegen_flags: <defaults>
</compile_context>

<pallas_src>
import functools

import jax
import jax.numpy as jnp
from jax.experimental import pallas as pl
from jax.experimental.pallas import tpu as pltpu


# ----------------------------------------------------------------------------
# In-kernel helpers
# ----------------------------------------------------------------------------
def _pointwise(wt, x):
    """(Co, Ci) @ (Ci, L) contraction.

    For tiny channel counts, do unrolled f32 VPU broadcast-MACs (keeps full
    f32 precision and avoids feeding a K<=32 contraction to the MXU);
    otherwise use the MXU with default precision and f32 accumulation."""
    _, ci = wt.shape
    if ci <= 32:
        acc = wt[:, 0:1] * x[0:1, :]
        for c in range(1, ci):
            acc = acc + wt[:, c:c + 1] * x[c:c + 1, :]
        return acc
    return jnp.dot(wt, x, preferred_element_type=jnp.float32)


def _fused_kernel(x_ref, w1t_ref, s1_ref, b1_ref, w2_ref, s2_ref, b2_ref,
                  mask_ref, w3t_ref, s3_ref, b3_ref, *rest,
                  W, stride, use_res):
    """Whole InvertedResidual block for one batch element, all in VMEM.

    x_ref:    (1, Cin, H*W)      input in NCHW order, spatial flattened
    w1t_ref:  (Chid, Cin)        expand 1x1 weight (transposed)
    w2_ref:   (Chid, 9)          depthwise 3x3 weight, tap index = ki*3+kj
    mask_ref: (9, H*W)           0/1 border-validity mask per tap
    w3t_ref:  (Cout, Chid)       project 1x1 weight (transposed)
    s*/b*:    per-channel folded-BN scale/bias as column vectors (C, 1)
    o_ref:    (1, Cout, Ho*Wo)
    """
    if stride == 2:
        sel_ref, o_ref = rest
    else:
        (o_ref,) = rest

    x = x_ref[0]                                   # (Cin, H*W) f32
    HW = x.shape[-1]

    # ---- 1) expand 1x1 conv + BN + ReLU --------------------------------
    h = _pointwise(w1t_ref[...], x)                # (Chid, H*W)
    h = jnp.maximum(h * s1_ref[...] + b1_ref[...], 0.0)

    # ---- 2) depthwise 3x3, pad=1: 9 lane-rolls (XLU) + border masks ----
    acc = jnp.zeros_like(h)
    for ki in range(3):
        for kj in range(3):
            off = (ki - 1) * W + (kj - 1)          # flat-index offset of tap
            tap = ki * 3 + kj
            wt = w2_ref[:, tap:tap + 1]            # (Chid, 1)
            if off == 0:
                acc = acc + h * wt                 # center tap: mask is all-1
            else:
                shifted = pltpu.roll(h, (-off) % HW, axis=1)
                acc = acc + shifted * wt * mask_ref[tap:tap + 1, :]
    h = jnp.maximum(acc * s2_ref[...] + b2_ref[...], 0.0)   # (Chid, H*W)

    # ---- stride-2: compact the full-resolution map with a 0/1 gather ---
    if stride == 2:
        h = jnp.dot(h, sel_ref[...], preferred_element_type=jnp.float32)

    # ---- 3) project 1x1 conv + BN (+ residual) --------------------------
    y = _pointwise(w3t_ref[...], h)                # (Cout, Ho*Wo)
    y = y * s3_ref[...] + b3_ref[...]
    if use_res:
        y = y + x                                  # stride==1, Cin==Cout only
    o_ref[0] = y.astype(o_ref.dtype)


# ----------------------------------------------------------------------------
# Host-side constant builders (tiny, dependent only on static shapes)
# ----------------------------------------------------------------------------
def _border_masks(H, W):
    """(9, H*W) f32 validity mask for each depthwise tap (zero padding)."""
    r = jnp.arange(H).reshape(H, 1)
    c = jnp.arange(W).reshape(1, W)
    rows = []
    for ki in range(3):
        for kj in range(3):
            di, dj = ki - 1, kj - 1
            valid = ((r + di >= 0) & (r + di < H) &
                     (c + dj >= 0) & (c + dj < W))
            rows.append(valid.reshape(1, H * W))
    return jnp.concatenate(rows, axis=0).astype(jnp.float32)


def _downsample_matrix(H, W, Ho, Wo, stride):
    """(H*W, Ho*Wo) 0/1 matrix selecting the stride-s output pixels."""
    p = jnp.arange(H * W).reshape(H * W, 1)
    q = jnp.arange(Ho * Wo).reshape(1, Ho * Wo)
    src = (q // Wo) * (stride * W) + (q % Wo) * stride
    return (p == src).astype(jnp.float32)


def _full_spec_2d(a):
    return pl.BlockSpec(a.shape, lambda n: (0, 0))


# ----------------------------------------------------------------------------
# Wrapper
# ----------------------------------------------------------------------------
def inverted_residual(x_nchw, params, *, stride, use_res_connect):
    """Forward pass matching the PyTorch InvertedResidual (eval-mode BN)."""
    assert stride in (1, 2)
    N, Cin, H, W = x_nchw.shape
    Cout = params["w3t"].shape[0]
    if use_res_connect and (stride != 1 or Cin != Cout):
        raise ValueError("residual connection requires stride==1 and inp==oup")

    Ho = (H + 2 - 3) // stride + 1
    Wo = (W + 2 - 3) // stride + 1
    HW, HoWo = H * W, Ho * Wo

    x = x_nchw.reshape(N, Cin, HW).astype(jnp.float32)   # free reshape (NCHW)
    masks = _border_masks(H, W)

    inputs = [x, params["w1t"], params["s1"], params["b1"],
              params["w2"], params["s2"], params["b2"], masks,
              params["w3t"], params["s3"], params["b3"]]
    in_specs = ([pl.BlockSpec((1, Cin, HW), lambda n: (n, 0, 0))]
                + [_full_spec_2d(a) for a in inputs[1:]])

    if stride == 2:
        sel = _downsample_matrix(H, W, Ho, Wo, stride)
        inputs.append(sel)
        in_specs.append(_full_spec_2d(sel))

    out = pl.pallas_call(
        functools.partial(_fused_kernel, W=W, stride=stride,
                          use_res=use_res_connect),
        out_shape=jax.ShapeDtypeStruct((N, Cout, HoWo), jnp.float32),
        grid=(N,),
        in_specs=in_specs,
        out_specs=pl.BlockSpec((1, Cout, HoWo), lambda n: (n, 0, 0)),
        compiler_params=pltpu.CompilerParams(
            dimension_semantics=("parallel",)),
    )(*inputs)
    return out.reshape(N, Cout, Ho, Wo)                   # already NCHW


# ----------------------------------------------------------------------------
# Pure-JAX reference (sanity check only)
# ----------------------------------------------------------------------------
def _reference(x_nchw, params, *, stride, use_res_connect):
    hi = jax.lax.Precision.HIGHEST
    x = x_nchw.astype(jnp.float32)
    N, Cin, H, W = x.shape
    Chid = params["w1t"].shape[0]
    h = jnp.einsum("ec,nchw->nehw", params["w1t"], x, precision=hi)
    h = h * params["s1"].reshape(1, Chid, 1, 1) + params["b1"].reshape(1, Chid, 1, 1)
    h = jnp.maximum(h, 0.0)
    Ho = (H + 2 - 3) // stride + 1
    Wo = (W + 2 - 3) // stride + 1
    hp = jnp.pad(h, ((0, 0), (0, 0), (1, 1), (1, 1)))
    w2 = params["w2"].reshape(Chid, 3, 3)
    acc = jnp.zeros((N, Chid, Ho, Wo), jnp.float32)
    for ki in range(3):
        for kj in range(3):
            acc = acc + hp[:, :, ki:ki + stride * Ho:stride,
                           kj:kj + stride * Wo:stride] \
                        * w2[:, ki, kj].reshape(1, Chid, 1, 1)
    h = jnp.maximum(acc * params["s2"].reshape(1, Chid, 1, 1)
                    + params["b2"].reshape(1, Chid, 1, 1), 0.0)
    out = jnp.einsum("oe,nehw->nohw", params["w3t"], h, precision=hi)
    out = out * params["s3"].reshape(1, -1, 1, 1) + params["b3"].reshape(1, -1, 1, 1)
    if use_res_connect:
        out = out + x
    return out


# ----------------------------------------------------------------------------
# Parameter construction (deterministic, synthetic; eval-mode BN folded)
# ----------------------------------------------------------------------------
def _fold_bn(gamma, beta, mean, var, eps=1e-5):
    scale = gamma / jnp.sqrt(var + eps)
    bias = beta - mean * scale
    return scale, bias


def make_params(key, inp, oup, expand_ratio=6):
    hidden = inp * expand_ratio
    ks = jax.random.split(key, 12)
    w1t = 0.1 * jax.random.normal(ks[0], (hidden, inp), jnp.float32)   # (Chid, Cin)
    w2 = 0.1 * jax.random.normal(ks[1], (hidden, 9), jnp.float32)      # (Chid, 3*3)
    w3t = 0.1 * jax.random.normal(ks[2], (oup, hidden), jnp.float32)   # (Cout, Chid)

    def bn(kg, kb, km, kv, c):
        gamma = 1.0 + 0.1 * jax.random.normal(kg, (c,), jnp.float32)
        beta = 0.1 * jax.random.normal(kb, (c,), jnp.float32)
        mean = 0.1 * jax.random.normal(km, (c,), jnp.float32)
        var = jnp.abs(jax.random.normal(kv, (c,), jnp.float32)) + 0.5
        return _fold_bn(gamma, beta, mean, var)

    s1, b1 = bn(ks[3], ks[4], ks[5], ks[6], hidden)
    s2, b2 = bn(ks[7], ks[8], ks[9], ks[10], hidden)
    s3, b3 = bn(ks[11], ks[3], ks[5], ks[7], oup)   # deterministic reuse is fine
    return {
        "w1t": w1t, "s1": s1.reshape(hidden, 1), "b1": b1.reshape(hidden, 1),
        "w2": w2, "s2": s2.reshape(hidden, 1), "b2": b2.reshape(hidden, 1),
        "w3t": w3t, "s3": s3.reshape(oup, 1), "b3": b3.reshape(oup, 1),
    }


if __name__ == "__main__":
    key = jax.random.PRNGKey(0)
    k_x, k_p = jax.random.split(key)

    # module config: inp=4, oup=4, stride=1, use_res_connect=True, expand=6
    inp, oup, stride, use_res_connect = 4, 4, 1, True
    N, H, W = 2, 16, 16

    x = jax.random.normal(k_x, (N, inp, H, W), jnp.float32)   # NCHW like PyTorch
    params = make_params(k_p, inp, oup)

    out = inverted_residual(x, params, stride=stride,
                            use_res_connect=use_res_connect)
    out = jax.block_until_ready(out)

    ref = _reference(x, params, stride=stride,
                     use_res_connect=use_res_connect)
    assert out.shape == (N, oup, H, W)
    # f32 everywhere in-kernel; tolerance only covers accumulation-order noise.
    assert jnp.allclose(out, ref, rtol=1e-3, atol=1e-3), \
        float(jnp.max(jnp.abs(out - ref)))

    print("KERNEL_OK")
</pallas_src>

<mosaic_0001>
module attributes {stable_mosaic.version = 11 : i64} {
  func.func @_fused_kernel(%arg0: i32, %arg1: memref<1x4x256xf32, #tpu.memory_space<vmem>>, %arg2: memref<24x4xf32, #tpu.memory_space<vmem>>, %arg3: memref<24x1xf32, #tpu.memory_space<vmem>>, %arg4: memref<24x1xf32, #tpu.memory_space<vmem>>, %arg5: memref<24x9xf32, #tpu.memory_space<vmem>>, %arg6: memref<24x1xf32, #tpu.memory_space<vmem>>, %arg7: memref<24x1xf32, #tpu.memory_space<vmem>>, %arg8: memref<9x256xf32, #tpu.memory_space<vmem>>, %arg9: memref<4x24xf32, #tpu.memory_space<vmem>>, %arg10: memref<4x1xf32, #tpu.memory_space<vmem>>, %arg11: memref<4x1xf32, #tpu.memory_space<vmem>>, %arg12: memref<1x4x256xf32, #tpu.memory_space<vmem>>) attributes {dimension_semantics = [#tpu.dimension_semantics<parallel>], iteration_bounds = array<i64: 2>, scalar_prefetch = 0 : i64, scratch_operands = 0 : i64, tpu.core_type = #tpu.core_type<tc>, window_params = [{transform_indices = @transform_0, window_bounds = array<i64: 1, 4, 256>}, {pipeline_mode = #tpu.pipeline_mode<synchronous>, transform_indices = @transform_1, window_bounds = array<i64: 24, 4>}, {pipeline_mode = #tpu.pipeline_mode<synchronous>, transform_indices = @transform_2, window_bounds = array<i64: 24, 1>}, {pipeline_mode = #tpu.pipeline_mode<synchronous>, transform_indices = @transform_3, window_bounds = array<i64: 24, 1>}, {pipeline_mode = #tpu.pipeline_mode<synchronous>, transform_indices = @transform_4, window_bounds = array<i64: 24, 9>}, {pipeline_mode = #tpu.pipeline_mode<synchronous>, transform_indices = @transform_5, window_bounds = array<i64: 24, 1>}, {pipeline_mode = #tpu.pipeline_mode<synchronous>, transform_indices = @transform_6, window_bounds = array<i64: 24, 1>}, {pipeline_mode = #tpu.pipeline_mode<synchronous>, transform_indices = @transform_7, window_bounds = array<i64: 9, 256>}, {pipeline_mode = #tpu.pipeline_mode<synchronous>, transform_indices = @transform_8, window_bounds = array<i64: 4, 24>}, {pipeline_mode = #tpu.pipeline_mode<synchronous>, transform_indices = @transform_9, window_bounds = array<i64: 4, 1>}, {pipeline_mode = #tpu.pipeline_mode<synchronous>, transform_indices = @transform_10, window_bounds = array<i64: 4, 1>}, {transform_indices = @transform_11, window_bounds = array<i64: 1, 4, 256>}]} {
    %c0 = arith.constant 0 : index
    %c0_0 = arith.constant 0 : index
    %c0_1 = arith.constant 0 : index
    %0 = vector.load %arg1[%c0, %c0_0, %c0_1] : memref<1x4x256xf32, #tpu.memory_space<vmem>>, vector<1x4x256xf32>
    %1 = vector.shape_cast %0 : vector<1x4x256xf32> to vector<4x256xf32>
    %c0_2 = arith.constant 0 : index
    %c0_3 = arith.constant 0 : index
    %2 = vector.load %arg2[%c0_2, %c0_3] : memref<24x4xf32, #tpu.memory_space<vmem>>, vector<24x4xf32>
    %3 = vector.extract_strided_slice %2 {offsets = [0, 0], sizes = [24, 1], strides = [1, 1]} : vector<24x4xf32> to vector<24x1xf32>
    %4 = vector.extract_strided_slice %1 {offsets = [0, 0], sizes = [1, 256], strides = [1, 1]} : vector<4x256xf32> to vector<1x256xf32>
    %5 = vector.broadcast %3 : vector<24x1xf32> to vector<24x256xf32>
    %6 = vector.broadcast %4 : vector<1x256xf32> to vector<24x256xf32>
    %7 = arith.mulf %5, %6 : vector<24x256xf32>
    %8 = vector.extract_strided_slice %2 {offsets = [0, 1], sizes = [24, 1], strides = [1, 1]} : vector<24x4xf32> to vector<24x1xf32>
    %9 = vector.extract_strided_slice %1 {offsets = [1, 0], sizes = [1, 256], strides = [1, 1]} : vector<4x256xf32> to vector<1x256xf32>
    %10 = vector.broadcast %8 : vector<24x1xf32> to vector<24x256xf32>
    %11 = vector.broadcast %9 : vector<1x256xf32> to vector<24x256xf32>
    %12 = arith.mulf %10, %11 : vector<24x256xf32>
    %13 = arith.addf %7, %12 : vector<24x256xf32>
    %14 = vector.extract_strided_slice %2 {offsets = [0, 2], sizes = [24, 1], strides = [1, 1]} : vector<24x4xf32> to vector<24x1xf32>
    %15 = vector.extract_strided_slice %1 {offsets = [2, 0], sizes = [1, 256], strides = [1, 1]} : vector<4x256xf32> to vector<1x256xf32>
    %16 = vector.broadcast %14 : vector<24x1xf32> to vector<24x256xf32>
    %17 = vector.broadcast %15 : vector<1x256xf32> to vector<24x256xf32>
    %18 = arith.mulf %16, %17 : vector<24x256xf32>
    %19 = arith.addf %13, %18 : vector<24x256xf32>
    %20 = vector.extract_strided_slice %2 {offsets = [0, 3], sizes = [24, 1], strides = [1, 1]} : vector<24x4xf32> to vector<24x1xf32>
    %21 = vector.extract_strided_slice %1 {offsets = [3, 0], sizes = [1, 256], strides = [1, 1]} : vector<4x256xf32> to vector<1x256xf32>
    %22 = vector.broadcast %20 : vector<24x1xf32> to vector<24x256xf32>
    %23 = vector.broadcast %21 : vector<1x256xf32> to vector<24x256xf32>
    %24 = arith.mulf %22, %23 : vector<24x256xf32>
    %25 = arith.addf %19, %24 : vector<24x256xf32>
    %c0_4 = arith.constant 0 : index
    %c0_5 = arith.constant 0 : index
    %26 = vector.load %arg3[%c0_4, %c0_5] : memref<24x1xf32, #tpu.memory_space<vmem>>, vector<24x1xf32>
    %27 = vector.broadcast %26 : vector<24x1xf32> to vector<24x256xf32>
    %28 = arith.mulf %25, %27 : vector<24x256xf32>
    %c0_6 = arith.constant 0 : index
    %c0_7 = arith.constant 0 : index
    %29 = vector.load %arg4[%c0_6, %c0_7] : memref<24x1xf32, #tpu.memory_space<vmem>>, vector<24x1xf32>
    %30 = vector.broadcast %29 : vector<24x1xf32> to vector<24x256xf32>
    %31 = arith.addf %28, %30 : vector<24x256xf32>
    %cst = arith.constant 0.000000e+00 : f32
    %32 = vector.broadcast %cst : f32 to vector<24x256xf32>
    %33 = arith.maximumf %31, %32 : vector<24x256xf32>
    %cst_8 = arith.constant 0.000000e+00 : f32
    %34 = vector.broadcast %cst_8 : f32 to vector<24x256xf32>
    %c0_9 = arith.constant 0 : index
    %c0_10 = arith.constant 0 : index
    %35 = vector.load %arg5[%c0_9, %c0_10] : memref<24x9xf32, #tpu.memory_space<vmem>>, vector<24x1xf32>
    %c17_i32 = arith.constant 17 : i32
    %36 = tpu.dynamic_rotate %33 by %c17_i32 dim 1 : vector<24x256xf32>, i32 -> vector<24x256xf32>
    %37 = vector.broadcast %35 : vector<24x1xf32> to vector<24x256xf32>
    %38 = arith.mulf %36, %37 : vector<24x256xf32>
    %c0_11 = arith.constant 0 : index
    %c0_12 = arith.constant 0 : index
    %39 = vector.load %arg8[%c0_11, %c0_12] : memref<9x256xf32, #tpu.memory_space<vmem>>, vector<1x256xf32>
    %40 = vector.broadcast %39 : vector<1x256xf32> to vector<24x256xf32>
    %41 = arith.mulf %38, %40 : vector<24x256xf32>
    %42 = arith.addf %34, %41 : vector<24x256xf32>
    %c0_13 = arith.constant 0 : index
    %c1 = arith.constant 1 : index
    %43 = vector.load %arg5[%c0_13, %c1] : memref<24x9xf32, #tpu.memory_space<vmem>>, vector<24x1xf32>
    %c16_i32 = arith.constant 16 : i32
    %44 = tpu.dynamic_rotate %33 by %c16_i32 dim 1 : vector<24x256xf32>, i32 -> vector<24x256xf32>
    %45 = vector.broadcast %43 : vector<24x1xf32> to vector<24x256xf32>
    %46 = arith.mulf %44, %45 : vector<24x256xf32>
    %c1_14 = arith.constant 1 : index
    %c0_15 = arith.constant 0 : index
    %47 = vector.load %arg8[%c1_14, %c0_15] : memref<9x256xf32, #tpu.memory_space<vmem>>, vector<1x256xf32>
    %48 = vector.broadcast %47 : vector<1x256xf32> to vector<24x256xf32>
    %49 = arith.mulf %46, %48 : vector<24x256xf32>
    %50 = arith.addf %42, %49 : vector<24x256xf32>
    %c0_16 = arith.constant 0 : index
    %c2 = arith.constant 2 : index
    %51 = vector.load %arg5[%c0_16, %c2] : memref<24x9xf32, #tpu.memory_space<vmem>>, vector<24x1xf32>
    %c15_i32 = arith.constant 15 : i32
    %52 = tpu.dynamic_rotate %33 by %c15_i32 dim 1 : vector<24x256xf32>, i32 -> vector<24x256xf32>
    %53 = vector.broadcast %51 : vector<24x1xf32> to vector<24x256xf32>
    %54 = arith.mulf %52, %53 : vector<24x256xf32>
    %c2_17 = arith.constant 2 : index
    %c0_18 = arith.constant 0 : index
    %55 = vector.load %arg8[%c2_17, %c0_18] : memref<9x256xf32, #tpu.memory_space<vmem>>, vector<1x256xf32>
    %56 = vector.broadcast %55 : vector<1x256xf32> to vector<24x256xf32>
    %57 = arith.mulf %54, %56 : vector<24x256xf32>
    %58 = arith.addf %50, %57 : vector<24x256xf32>
    %c0_19 = arith.constant 0 : index
    %c3 = arith.constant 3 : index
    %59 = vector.load %arg5[%c0_19, %c3] : memref<24x9xf32, #tpu.memory_space<vmem>>, vector<24x1xf32>
    %c1_i32 = arith.constant 1 : i32
    %60 = tpu.dynamic_rotate %33 by %c1_i32 dim 1 : vector<24x256xf32>, i32 -> vector<24x256xf32>
    %61 = vector.broadcast %59 : vector<24x1xf32> to vector<24x256xf32>
    %62 = arith.mulf %60, %61 : vector<24x256xf32>
    %c3_20 = arith.constant 3 : index
    %c0_21 = arith.constant 0 : index
    %63 = vector.load %arg8[%c3_20, %c0_21] : memref<9x256xf32, #tpu.memory_space<vmem>>, vector<1x256xf32>
    %64 = vector.broadcast %63 : vector<1x256xf32> to vector<24x256xf32>
    %65 = arith.mulf %62, %64 : vector<24x256xf32>
    %66 = arith.addf %58, %65 : vector<24x256xf32>
    %c0_22 = arith.constant 0 : index
    %c4 = arith.constant 4 : index
    %67 = vector.load %arg5[%c0_22, %c4] : memref<24x9xf32, #tpu.memory_space<vmem>>, vector<24x1xf32>
    %68 = vector.broadcast %67 : vector<24x1xf32> to vector<24x256xf32>
    %69 = arith.mulf %33, %68 : vector<24x256xf32>
    %70 = arith.addf %66, %69 : vector<24x256xf32>
    %c0_23 = arith.constant 0 : index
    %c5 = arith.constant 5 : index
    %71 = vector.load %arg5[%c0_23, %c5] : memref<24x9xf32, #tpu.memory_space<vmem>>, vector<24x1xf32>
    %c255_i32 = arith.constant 255 : i32
    %72 = tpu.dynamic_rotate %33 by %c255_i32 dim 1 : vector<24x256xf32>, i32 -> vector<24x256xf32>
    %73 = vector.broadcast %71 : vector<24x1xf32> to vector<24x256xf32>
    %74 = arith.mulf %72, %73 : vector<24x256xf32>
    %c5_24 = arith.constant 5 : index
    %c0_25 = arith.constant 0 : index
    %75 = vector.load %arg8[%c5_24, %c0_25] : memref<9x256xf32, #tpu.memory_space<vmem>>, vector<1x256xf32>
    %76 = vector.broadcast %75 : vector<1x256xf32> to vector<24x256xf32>
    %77 = arith.mulf %74, %76 : vector<24x256xf32>
    %78 = arith.addf %70, %77 : vector<24x256xf32>
    %c0_26 = arith.constant 0 : index
    %c6 = arith.constant 6 : index
    %79 = vector.load %arg5[%c0_26, %c6] : memref<24x9xf32, #tpu.memory_space<vmem>>, vector<24x1xf32>
    %c241_i32 = arith.constant 241 : i32
    %80 = tpu.dynamic_rotate %33 by %c241_i32 dim 1 : vector<24x256xf32>, i32 -> vector<24x256xf32>
    %81 = vector.broadcast %79 : vector<24x1xf32> to vector<24x256xf32>
    %82 = arith.mulf %80, %81 : vector<24x256xf32>
    %c6_27 = arith.constant 6 : index
    %c0_28 = arith.constant 0 : index
    %83 = vector.load %arg8[%c6_27, %c0_28] : memref<9x256xf32, #tpu.memory_space<vmem>>, vector<1x256xf32>
    %84 = vector.broadcast %83 : vector<1x256xf32> to vector<24x256xf32>
    %85 = arith.mulf %82, %84 : vector<24x256xf32>
    %86 = arith.addf %78, %85 : vector<24x256xf32>
    %c0_29 = arith.constant 0 : index
    %c7 = arith.constant 7 : index
    %87 = vector.load %arg5[%c0_29, %c7] : memref<24x9xf32, #tpu.memory_space<vmem>>, vector<24x1xf32>
    %c240_i32 = arith.constant 240 : i32
    %88 = tpu.dynamic_rotate %33 by %c240_i32 dim 1 : vector<24x256xf32>, i32 -> vector<24x256xf32>
    %89 = vector.broadcast %87 : vector<24x1xf32> to vector<24x256xf32>
    %90 = arith.mulf %88, %89 : vector<24x256xf32>
    %c7_30 = arith.constant 7 : index
    %c0_31 = arith.constant 0 : index
    %91 = vector.load %arg8[%c7_30, %c0_31] : memref<9x256xf32, #tpu.memory_space<vmem>>, vector<1x256xf32>
    %92 = vector.broadcast %91 : vector<1x256xf32> to vector<24x256xf32>
    %93 = arith.mulf %90, %92 : vector<24x256xf32>
    %94 = arith.addf %86, %93 : vector<24x256xf32>
    %c0_32 = arith.constant 0 : index
    %c8 = arith.constant 8 : index
    %95 = vector.load %arg5[%c0_32, %c8] : memref<24x9xf32, #tpu.memory_space<vmem>>, vector<24x1xf32>
    %c239_i32 = arith.constant 239 : i32
    %96 = tpu.dynamic_rotate %33 by %c239_i32 dim 1 : vector<24x256xf32>, i32 -> vector<24x256xf32>
    %97 = vector.broadcast %95 : vector<24x1xf32> to vector<24x256xf32>
    %98 = arith.mulf %96, %97 : vector<24x256xf32>
    %c8_33 = arith.constant 8 : index
    %c0_34 = arith.constant 0 : index
    %99 = vector.load %arg8[%c8_33, %c0_34] : memref<9x256xf32, #tpu.memory_space<vmem>>, vector<1x256xf32>
    %100 = vector.broadcast %99 : vector<1x256xf32> to vector<24x256xf32>
    %101 = arith.mulf %98, %100 : vector<24x256xf32>
    %102 = arith.addf %94, %101 : vector<24x256xf32>
    %c0_35 = arith.constant 0 : index
    %c0_36 = arith.constant 0 : index
    %103 = vector.load %arg6[%c0_35, %c0_36] : memref<24x1xf32, #tpu.memory_space<vmem>>, vector<24x1xf32>
    %104 = vector.broadcast %103 : vector<24x1xf32> to vector<24x256xf32>
    %105 = arith.mulf %102, %104 : vector<24x256xf32>
    %c0_37 = arith.constant 0 : index
    %c0_38 = arith.constant 0 : index
    %106 = vector.load %arg7[%c0_37, %c0_38] : memref<24x1xf32, #tpu.memory_space<vmem>>, vector<24x1xf32>
    %107 = vector.broadcast %106 : vector<24x1xf32> to vector<24x256xf32>
    %108 = arith.addf %105, %107 : vector<24x256xf32>
    %cst_39 = arith.constant 0.000000e+00 : f32
    %109 = vector.broadcast %cst_39 : f32 to vector<24x256xf32>
    %110 = arith.maximumf %108, %109 : vector<24x256xf32>
    %c0_40 = arith.constant 0 : index
    %c0_41 = arith.constant 0 : index
    %111 = vector.load %arg9[%c0_40, %c0_41] : memref<4x24xf32, #tpu.memory_space<vmem>>, vector<4x24xf32>
    %112 = vector.extract_strided_slice %111 {offsets = [0, 0], sizes = [4, 1], strides = [1, 1]} : vector<4x24xf32> to vector<4x1xf32>
    %113 = vector.extract_strided_slice %110 {offsets = [0, 0], sizes = [1, 256], strides = [1, 1]} : vector<24x256xf32> to vector<1x256xf32>
    %114 = vector.broadcast %112 : vector<4x1xf32> to vector<4x256xf32>
    %115 = vector.broadcast %113 : vector<1x256xf32> to vector<4x256xf32>
    %116 = arith.mulf %114, %115 : vector<4x256xf32>
    %117 = vector.extract_strided_slice %111 {offsets = [0, 1], sizes = [4, 1], strides = [1, 1]} : vector<4x24xf32> to vector<4x1xf32>
    %118 = vector.extract_strided_slice %110 {offsets = [1, 0], sizes = [1, 256], strides = [1, 1]} : vector<24x256xf32> to vector<1x256xf32>
    %119 = vector.broadcast %117 : vector<4x1xf32> to vector<4x256xf32>
    %120 = vector.broadcast %118 : vector<1x256xf32> to vector<4x256xf32>
    %121 = arith.mulf %119, %120 : vector<4x256xf32>
    %122 = arith.addf %116, %121 : vector<4x256xf32>
    %123 = vector.extract_strided_slice %111 {offsets = [0, 2], sizes = [4, 1], strides = [1, 1]} : vector<4x24xf32> to vector<4x1xf32>
    %124 = vector.extract_strided_slice %110 {offsets = [2, 0], sizes = [1, 256], strides = [1, 1]} : vector<24x256xf32> to vector<1x256xf32>
    %125 = vector.broadcast %123 : vector<4x1xf32> to vector<4x256xf32>
    %126 = vector.broadcast %124 : vector<1x256xf32> to vector<4x256xf32>
    %127 = arith.mulf %125, %126 : vector<4x256xf32>
    %128 = arith.addf %122, %127 : vector<4x256xf32>
    %129 = vector.extract_strided_slice %111 {offsets = [0, 3], sizes = [4, 1], strides = [1, 1]} : vector<4x24xf32> to vector<4x1xf32>
    %130 = vector.extract_strided_slice %110 {offsets = [3, 0], sizes = [1, 256], strides = [1, 1]} : vector<24x256xf32> to vector<1x256xf32>
    %131 = vector.broadcast %129 : vector<4x1xf32> to vector<4x256xf32>
    %132 = vector.broadcast %130 : vector<1x256xf32> to vector<4x256xf32>
    %133 = arith.mulf %131, %132 : vector<4x256xf32>
    %134 = arith.addf %128, %133 : vector<4x256xf32>
    %135 = vector.extract_strided_slice %111 {offsets = [0, 4], sizes = [4, 1], strides = [1, 1]} : vector<4x24xf32> to vector<4x1xf32>
    %136 = vector.extract_strided_slice %110 {offsets = [4, 0], sizes = [1, 256], strides = [1, 1]} : vector<24x256xf32> to vector<1x256xf32>
    %137 = vector.broadcast %135 : vector<4x1xf32> to vector<4x256xf32>
    %138 = vector.broadcast %136 : vector<1x256xf32> to vector<4x256xf32>
    %139 = arith.mulf %137, %138 : vector<4x256xf32>
    %140 = arith.addf %134, %139 : vector<4x256xf32>
    %141 = vector.extract_strided_slice %111 {offsets = [0, 5], sizes = [4, 1], strides = [1, 1]} : vector<4x24xf32> to vector<4x1xf32>
    %142 = vector.extract_strided_slice %110 {offsets = [5, 0], sizes = [1, 256], strides = [1, 1]} : vector<24x256xf32> to vector<1x256xf32>
    %143 = vector.broadcast %141 : vector<4x1xf32> to vector<4x256xf32>
    %144 = vector.broadcast %142 : vector<1x256xf32> to vector<4x256xf32>
    %145 = arith.mulf %143, %144 : vector<4x256xf32>
    %146 = arith.addf %140, %145 : vector<4x256xf32>
    %147 = vector.extract_strided_slice %111 {offsets = [0, 6], sizes = [4, 1], strides = [1, 1]} : vector<4x24xf32> to vector<4x1xf32>
    %148 = vector.extract_strided_slice %110 {offsets = [6, 0], sizes = [1, 256], strides = [1, 1]} : vector<24x256xf32> to vector<1x256xf32>
    %149 = vector.broadcast %147 : vector<4x1xf32> to vector<4x256xf32>
    %150 = vector.broadcast %148 : vector<1x256xf32> to vector<4x256xf32>
    %151 = arith.mulf %149, %150 : vector<4x256xf32>
    %152 = arith.addf %146, %151 : vector<4x256xf32>
    %153 = vector.extract_strided_slice %111 {offsets = [0, 7], sizes = [4, 1], strides = [1, 1]} : vector<4x24xf32> to vector<4x1xf32>
    %154 = vector.extract_strided_slice %110 {offsets = [7, 0], sizes = [1, 256], strides = [1, 1]} : vector<24x256xf32> to vector<1x256xf32>
    %155 = vector.broadcast %153 : vector<4x1xf32> to vector<4x256xf32>
    %156 = vector.broadcast %154 : vector<1x256xf32> to vector<4x256xf32>
    %157 = arith.mulf %155, %156 : vector<4x256xf32>
    %158 = arith.addf %152, %157 : vector<4x256xf32>
    %159 = vector.extract_strided_slice %111 {offsets = [0, 8], sizes = [4, 1], strides = [1, 1]} : vector<4x24xf32> to vector<4x1xf32>
    %160 = vector.extract_strided_slice %110 {offsets = [8, 0], sizes = [1, 256], strides = [1, 1]} : vector<24x256xf32> to vector<1x256xf32>
    %161 = vector.broadcast %159 : vector<4x1xf32> to vector<4x256xf32>
    %162 = vector.broadcast %160 : vector<1x256xf32> to vector<4x256xf32>
    %163 = arith.mulf %161, %162 : vector<4x256xf32>
    %164 = arith.addf %158, %163 : vector<4x256xf32>
    %165 = vector.extract_strided_slice %111 {offsets = [0, 9], sizes = [4, 1], strides = [1, 1]} : vector<4x24xf32> to vector<4x1xf32>
    %166 = vector.extract_strided_slice %110 {offsets = [9, 0], sizes = [1, 256], strides = [1, 1]} : vector<24x256xf32> to vector<1x256xf32>
    %167 = vector.broadcast %165 : vector<4x1xf32> to vector<4x256xf32>
    %168 = vector.broadcast %166 : vector<1x256xf32> to vector<4x256xf32>
    %169 = arith.mulf %167, %168 : vector<4x256xf32>
    %170 = arith.addf %164, %169 : vector<4x256xf32>
    %171 = vector.extract_strided_slice %111 {offsets = [0, 10], sizes = [4, 1], strides = [1, 1]} : vector<4x24xf32> to vector<4x1xf32>
    %172 = vector.extract_strided_slice %110 {offsets = [10, 0], sizes = [1, 256], strides = [1, 1]} : vector<24x256xf32> to vector<1x256xf32>
    %173 = vector.broadcast %171 : vector<4x1xf32> to vector<4x256xf32>
    %174 = vector.broadcast %172 : vector<1x256xf32> to vector<4x256xf32>
    %175 = arith.mulf %173, %174 : vector<4x256xf32>
    %176 = arith.addf %170, %175 : vector<4x256xf32>
    %177 = vector.extract_strided_slice %111 {offsets = [0, 11], sizes = [4, 1], strides = [1, 1]} : vector<4x24xf32> to vector<4x1xf32>
    %178 = vector.extract_strided_slice %110 {offsets = [11, 0], sizes = [1, 256], strides = [1, 1]} : vector<24x256xf32> to vector<1x256xf32>
    %179 = vector.broadcast %177 : vector<4x1xf32> to vector<4x256xf32>
    %180 = vector.broadcast %178 : vector<1x256xf32> to vector<4x256xf32>
    %181 = arith.mulf %179, %180 : vector<4x256xf32>
    %182 = arith.addf %176, %181 : vector<4x256xf32>
    %183 = vector.extract_strided_slice %111 {offsets = [0, 12], sizes = [4, 1], strides = [1, 1]} : vector<4x24xf32> to vector<4x1xf32>
    %184 = vector.extract_strided_slice %110 {offsets = [12, 0], sizes = [1, 256], strides = [1, 1]} : vector<24x256xf32> to vector<1x256xf32>
    %185 = vector.broadcast %183 : vector<4x1xf32> to vector<4x256xf32>
    %186 = vector.broadcast %184 : vector<1x256xf32> to vector<4x256xf32>
    %187 = arith.mulf %185, %186 : vector<4x256xf32>
    %188 = arith.addf %182, %187 : vector<4x256xf32>
    %189 = vector.extract_strided_slice %111 {offsets = [0, 13], sizes = [4, 1], strides = [1, 1]} : vector<4x24xf32> to vector<4x1xf32>
    %190 = vector.extract_strided_slice %110 {offsets = [13, 0], sizes = [1, 256], strides = [1, 1]} : vector<24x256xf32> to vector<1x256xf32>
    %191 = vector.broadcast %189 : vector<4x1xf32> to vector<4x256xf32>
    %192 = vector.broadcast %190 : vector<1x256xf32> to vector<4x256xf32>
    %193 = arith.mulf %191, %192 : vector<4x256xf32>
    %194 = arith.addf %188, %193 : vector<4x256xf32>
    %195 = vector.extract_strided_slice %111 {offsets = [0, 14], sizes = [4, 1], strides = [1, 1]} : vector<4x24xf32> to vector<4x1xf32>
    %196 = vector.extract_strided_slice %110 {offsets = [14, 0], sizes = [1, 256], strides = [1, 1]} : vector<24x256xf32> to vector<1x256xf32>
    %197 = vector.broadcast %195 : vector<4x1xf32> to vector<4x256xf32>
    %198 = vector.broadcast %196 : vector<1x256xf32> to vector<4x256xf32>
    %199 = arith.mulf %197, %198 : vector<4x256xf32>
    %200 = arith.addf %194, %199 : vector<4x256xf32>
    %201 = vector.extract_strided_slice %111 {offsets = [0, 15], sizes = [4, 1], strides = [1, 1]} : vector<4x24xf32> to vector<4x1xf32>
    %202 = vector.extract_strided_slice %110 {offsets = [15, 0], sizes = [1, 256], strides = [1, 1]} : vector<24x256xf32> to vector<1x256xf32>
    %203 = vector.broadcast %201 : vector<4x1xf32> to vector<4x256xf32>
    %204 = vector.broadcast %202 : vector<1x256xf32> to vector<4x256xf32>
    %205 = arith.mulf %203, %204 : vector<4x256xf32>
    %206 = arith.addf %200, %205 : vector<4x256xf32>
    %207 = vector.extract_strided_slice %111 {offsets = [0, 16], sizes = [4, 1], strides = [1, 1]} : vector<4x24xf32> to vector<4x1xf32>
    %208 = vector.extract_strided_slice %110 {offsets = [16, 0], sizes = [1, 256], strides = [1, 1]} : vector<24x256xf32> to vector<1x256xf32>
    %209 = vector.broadcast %207 : vector<4x1xf32> to vector<4x256xf32>
    %210 = vector.broadcast %208 : vector<1x256xf32> to vector<4x256xf32>
    %211 = arith.mulf %209, %210 : vector<4x256xf32>
    %212 = arith.addf %206, %211 : vector<4x256xf32>
    %213 = vector.extract_strided_slice %111 {offsets = [0, 17], sizes = [4, 1], strides = [1, 1]} : vector<4x24xf32> to vector<4x1xf32>
    %214 = vector.extract_strided_slice %110 {offsets = [17, 0], sizes = [1, 256], strides = [1, 1]} : vector<24x256xf32> to vector<1x256xf32>
    %215 = vector.broadcast %213 : vector<4x1xf32> to vector<4x256xf32>
    %216 = vector.broadcast %214 : vector<1x256xf32> to vector<4x256xf32>
    %217 = arith.mulf %215, %216 : vector<4x256xf32>
    %218 = arith.addf %212, %217 : vector<4x256xf32>
    %219 = vector.extract_strided_slice %111 {offsets = [0, 18], sizes = [4, 1], strides = [1, 1]} : vector<4x24xf32> to vector<4x1xf32>
    %220 = vector.extract_strided_slice %110 {offsets = [18, 0], sizes = [1, 256], strides = [1, 1]} : vector<24x256xf32> to vector<1x256xf32>
    %221 = vector.broadcast %219 : vector<4x1xf32> to vector<4x256xf32>
    %222 = vector.broadcast %220 : vector<1x256xf32> to vector<4x256xf32>
    %223 = arith.mulf %221, %222 : vector<4x256xf32>
    %224 = arith.addf %218, %223 : vector<4x256xf32>
    %225 = vector.extract_strided_slice %111 {offsets = [0, 19], sizes = [4, 1], strides = [1, 1]} : vector<4x24xf32> to vector<4x1xf32>
    %226 = vector.extract_strided_slice %110 {offsets = [19, 0], sizes = [1, 256], strides = [1, 1]} : vector<24x256xf32> to vector<1x256xf32>
    %227 = vector.broadcast %225 : vector<4x1xf32> to vector<4x256xf32>
    %228 = vector.broadcast %226 : vector<1x256xf32> to vector<4x256xf32>
    %229 = arith.mulf %227, %228 : vector<4x256xf32>
    %230 = arith.addf %224, %229 : vector<4x256xf32>
    %231 = vector.extract_strided_slice %111 {offsets = [0, 20], sizes = [4, 1], strides = [1, 1]} : vector<4x24xf32> to vector<4x1xf32>
    %232 = vector.extract_strided_slice %110 {offsets = [20, 0], sizes = [1, 256], strides = [1, 1]} : vector<24x256xf32> to vector<1x256xf32>
    %233 = vector.broadcast %231 : vector<4x1xf32> to vector<4x256xf32>
    %234 = vector.broadcast %232 : vector<1x256xf32> to vector<4x256xf32>
    %235 = arith.mulf %233, %234 : vector<4x256xf32>
    %236 = arith.addf %230, %235 : vector<4x256xf32>
    %237 = vector.extract_strided_slice %111 {offsets = [0, 21], sizes = [4, 1], strides = [1, 1]} : vector<4x24xf32> to vector<4x1xf32>
    %238 = vector.extract_strided_slice %110 {offsets = [21, 0], sizes = [1, 256], strides = [1, 1]} : vector<24x256xf32> to vector<1x256xf32>
    %239 = vector.broadcast %237 : vector<4x1xf32> to vector<4x256xf32>
    %240 = vector.broadcast %238 : vector<1x256xf32> to vector<4x256xf32>
    %241 = arith.mulf %239, %240 : vector<4x256xf32>
    %242 = arith.addf %236, %241 : vector<4x256xf32>
    %243 = vector.extract_strided_slice %111 {offsets = [0, 22], sizes = [4, 1], strides = [1, 1]} : vector<4x24xf32> to vector<4x1xf32>
    %244 = vector.extract_strided_slice %110 {offsets = [22, 0], sizes = [1, 256], strides = [1, 1]} : vector<24x256xf32> to vector<1x256xf32>
    %245 = vector.broadcast %243 : vector<4x1xf32> to vector<4x256xf32>
    %246 = vector.broadcast %244 : vector<1x256xf32> to vector<4x256xf32>
    %247 = arith.mulf %245, %246 : vector<4x256xf32>
    %248 = arith.addf %242, %247 : vector<4x256xf32>
    %249 = vector.extract_strided_slice %111 {offsets = [0, 23], sizes = [4, 1], strides = [1, 1]} : vector<4x24xf32> to vector<4x1xf32>
    %250 = vector.extract_strided_slice %110 {offsets = [23, 0], sizes = [1, 256], strides = [1, 1]} : vector<24x256xf32> to vector<1x256xf32>
    %251 = vector.broadcast %249 : vector<4x1xf32> to vector<4x256xf32>
    %252 = vector.broadcast %250 : vector<1x256xf32> to vector<4x256xf32>
    %253 = arith.mulf %251, %252 : vector<4x256xf32>
    %254 = arith.addf %248, %253 : vector<4x256xf32>
    %c0_42 = arith.constant 0 : index
    %c0_43 = arith.constant 0 : index
    %255 = vector.load %arg10[%c0_42, %c0_43] : memref<4x1xf32, #tpu.memory_space<vmem>>, vector<4x1xf32>
    %256 = vector.broadcast %255 : vector<4x1xf32> to vector<4x256xf32>
    %257 = arith.mulf %254, %256 : vector<4x256xf32>
    %c0_44 = arith.constant 0 : index
    %c0_45 = arith.constant 0 : index
    %258 = vector.load %arg11[%c0_44, %c0_45] : memref<4x1xf32, #tpu.memory_space<vmem>>, vector<4x1xf32>
    %259 = vector.broadcast %258 : vector<4x1xf32> to vector<4x256xf32>
    %260 = arith.addf %257, %259 : vector<4x256xf32>
    %261 = arith.addf %260, %1 : vector<4x256xf32>
    %c0_46 = arith.constant 0 : index
    %c0_47 = arith.constant 0 : index
    %c0_48 = arith.constant 0 : index
    %262 = vector.load %arg12[%c0_46, %c0_47, %c0_48] : memref<1x4x256xf32, #tpu.memory_space<vmem>>, vector<1x4x256xf32>
    %263 = vector.shape_cast %262 : vector<1x4x256xf32> to vector<4x256xf32>
    %264 = vector.shape_cast %261 : vector<4x256xf32> to vector<1x4x256xf32>
    tpu.vector_store %arg12[%c0_46, %c0_47, %c0_48], %264 {strides = array<i32>} : memref<1x4x256xf32, #tpu.memory_space<vmem>>, vector<1x4x256xf32>,
    return
  }
  func.func @transform_0(%arg0: i32) -> (i32, i32, i32) {
    %c0_i32 = arith.constant 0 : i32
    %c0_i32_0 = arith.constant 0 : i32
    %c0_i32_1 = arith.constant 0 : i32
    return %arg0, %c0_i32, %c0_i32_0 : i32, i32, i32
  }
  func.func @transform_1(%arg0: i32) -> (i32, i32) {
    %c0_i32 = arith.constant 0 : i32
    %c0_i32_0 = arith.constant 0 : i32
    %c0_i32_1 = arith.constant 0 : i32
    return %c0_i32, %c0_i32_0 : i32, i32
  }
  func.func @transform_2(%arg0: i32) -> (i32, i32) {
    %c0_i32 = arith.constant 0 : i32
    %c0_i32_0 = arith.constant 0 : i32
    %c0_i32_1 = arith.constant 0 : i32
    return %c0_i32, %c0_i32_0 : i32, i32
  }
  func.func @transform_3(%arg0: i32) -> (i32, i32) {
    %c0_i32 = arith.constant 0 : i32
    %c0_i32_0 = arith.constant 0 : i32
    %c0_i32_1 = arith.constant 0 : i32
    return %c0_i32, %c0_i32_0 : i32, i32
  }
  func.func @transform_4(%arg0: i32) -> (i32, i32) {
    %c0_i32 = arith.constant 0 : i32
    %c0_i32_0 = arith.constant 0 : i32
    %c0_i32_1 = arith.constant 0 : i32
    return %c0_i32, %c0_i32_0 : i32, i32
  }
  func.func @transform_5(%arg0: i32) -> (i32, i32) {
    %c0_i32 = arith.constant 0 : i32
    %c0_i32_0 = arith.constant 0 : i32
    %c0_i32_1 = arith.constant 0 : i32
    return %c0_i32, %c0_i32_0 : i32, i32
  }
  func.func @transform_6(%arg0: i32) -> (i32, i32) {
    %c0_i32 = arith.constant 0 : i32
    %c0_i32_0 = arith.constant 0 : i32
    %c0_i32_1 = arith.constant 0 : i32
    return %c0_i32, %c0_i32_0 : i32, i32
  }
  func.func @transform_7(%arg0: i32) -> (i32, i32) {
    %c0_i32 = arith.constant 0 : i32
    %c0_i32_0 = arith.constant 0 : i32
    %c0_i32_1 = arith.constant 0 : i32
    return %c0_i32, %c0_i32_0 : i32, i32
  }
  func.func @transform_8(%arg0: i32) -> (i32, i32) {
    %c0_i32 = arith.constant 0 : i32
    %c0_i32_0 = arith.constant 0 : i32
    %c0_i32_1 = arith.constant 0 : i32
    return %c0_i32, %c0_i32_0 : i32, i32
  }
  func.func @transform_9(%arg0: i32) -> (i32, i32) {
    %c0_i32 = arith.constant 0 : i32
    %c0_i32_0 = arith.constant 0 : i32
    %c0_i32_1 = arith.constant 0 : i32
    return %c0_i32, %c0_i32_0 : i32, i32
  }
  func.func @transform_10(%arg0: i32) -> (i32, i32) {
    %c0_i32 = arith.constant 0 : i32
    %c0_i32_0 = arith.constant 0 : i32
    %c0_i32_1 = arith.constant 0 : i32
    return %c0_i32, %c0_i32_0 : i32, i32
  }
  func.func @transform_11(%arg0: i32) -> (i32, i32, i32) {
    %c0_i32 = arith.constant 0 : i32
    %c0_i32_0 = arith.constant 0 : i32
    %c0_i32_1 = arith.constant 0 : i32
    return %arg0, %c0_i32, %c0_i32_0 : i32, i32, i32
  }
}

</mosaic_0001>

<llo_original>
// kernel: tpu_custom_call.1
$region0: #{tpu_custom_call.1}
  #allocation0 [shape = 'u32[]', space=smem, size = 0x4, offset = 0x4, fixed_abs, tag = 'smem constant byte address 0x4 - core index']
  #allocation1 [shape = 'u32[72,128]{1,0:T(1,128)}', space=vmem, size = 0x9000, scoped, tag = 'internal scratch']
  %s0 = inlined_call_operand.vmem [shape: f32[2,4,256], index: 0, kind: input, shape index: {}]
  %s1 = inlined_call_operand.vmem [shape: f32[24,4], index: 1, kind: input, shape index: {}]
  %s2 = inlined_call_operand.vmem [shape: f32[24,1], index: 2, kind: input, shape index: {}]
  %s3 = inlined_call_operand.vmem [shape: f32[24,1], index: 3, kind: input, shape index: {}]
  %s4 = inlined_call_operand.vmem [shape: f32[24,9], index: 4, kind: input, shape index: {}]
  %s5 = inlined_call_operand.vmem [shape: f32[24,1], index: 5, kind: input, shape index: {}]
  %s6 = inlined_call_operand.vmem [shape: f32[24,1], index: 6, kind: input, shape index: {}]
  %s7 = inlined_call_operand.vmem [shape: f32[9,256], index: 7, kind: input, shape index: {}]
  %s8 = inlined_call_operand.vmem [shape: f32[4,24], index: 8, kind: input, shape index: {}]
  %s9 = inlined_call_operand.vmem [shape: f32[4,1], index: 9, kind: input, shape index: {}]
  %s10 = inlined_call_operand.vmem [shape: f32[4,1], index: 10, kind: input, shape index: {}]
  %s11 = inlined_call_operand.hbm [shape: f32[2,4,256], index: 11, kind: output, shape index: {}]
  %s12 = sld [smem:[#allocation0]]
  $region77: #{tpu_custom_call.1} parent=0
    _
  %s14 = ssub.s32 1, %s12
  %s15 = scalar_select 0, %s14, %s12
  $region1: #{tpu_custom_call.1} parent=0
    #allocation2 [shape = 'u8[8192]{0}', space=vmem, size = 0x2000, scoped, tag = 'output window, operand 0']
    #allocation3 [shape = 's32[2]{0}', space=sflag, size = 0x8, scoped, tag = 'scoped memory for tpu_custom_call.1']
    %16 = vsyncpa [#allocation3], 0
    %s17 = scalar_lea.sflag [#allocation3], 1
    %18 = vsyncpa %s17, 0
    loop: start=0, step=1, limit=4
    $region2: #{tpu_custom_call.1} parent=1 // loop_pre_header
      _
    $region3: #{tpu_custom_call.1} parent=1 // loop_header
      %s20 = sphi 0, %s24
      %p21 = scmp.ge.s32.totalorder %s20, 4
      %s30 = sphi 0, %s32
      %s33 = sphi 0, %s30
      %s34 = sphi 0, %s33
      %s50 = sphi 0, %s34
      %s54 = sphi 0, %s54
      %s56 = sphi 0, %s54
      %s57 = sphi 0, %s56
      %s71 = sphi 0, %s57
      %s75 = sphi 0, %s75
      %s77 = sphi 0, %s75
      %s78 = sphi 0, %s77
      %s92 = sphi 0, %s78
      %s96 = sphi 0, %s96
      %s98 = sphi 0, %s96
      %s99 = sphi 0, %s98
      %s113 = sphi 0, %s99
      %s117 = sphi 0, %s117
      %s119 = sphi 0, %s117
      %s120 = sphi 0, %s119
      %s134 = sphi 0, %s120
      %s138 = sphi 0, %s138
      %s140 = sphi 0, %s138
      %s141 = sphi 0, %s140
      %s155 = sphi 0, %s141
      %s159 = sphi 0, %s159
      %s161 = sphi 0, %s159
      %s162 = sphi 0, %s161
      %s176 = sphi 0, %s162
      %s180 = sphi 0, %s180
      %s182 = sphi 0, %s180
      %s183 = sphi 0, %s182
      %s197 = sphi 0, %s183
      %s201 = sphi 0, %s201
      %s203 = sphi 0, %s201
      %s204 = sphi 0, %s203
      %s218 = sphi 0, %s204
      %s222 = sphi 0, %s222
      %s224 = sphi 0, %s222
      %s225 = sphi 0, %s224
      %s239 = sphi 0, %s225
      %s243 = sphi 0, %s243
      %s245 = sphi 0, %s243
      %s246 = sphi 0, %s245
      %s260 = sphi 0, %s246
      %s266 = sphi 0, %s268
      %s269 = sphi 0, %s266
      %s270 = sphi 0, %s269
      %s286 = sphi 0, %s270
    $region4: #{tpu_custom_call.1} parent=1 // loop_header_branch
      %23 = sbr.rel (%p21) target = $region8
    $region5: #{tpu_custom_call.1} parent=1 // loop_body
      %s25 = ssub.s32 %s20, 1
      %s26 = ssub.s32 %s20, 2
      %s27 = sadd.s32 %s20, 1
      %s28 = ssub.s32 %s20, %s27
      %p29 = scmp.eq.s32.totalorder %s28, 0
      %s31 = sadd.s32 %s30, 1
      %s32 = scalar_select %p29, %s30, %s31
      %p35 = pneg %p29
      %p36 = scmp.eq.s32.totalorder %s20, 1
      %p37 = por %p35, %p36
      %p38 = scmp.ne.s32.totalorder %s30, %s33
      %p39 = scmp.eq.s32.totalorder %s20, 0
      %p40 = por %p38, %p39
      %p41 = scmp.ne.s32.totalorder %s30, %s33
      %p42 = scmp.eq.s32.totalorder %s25, 1
      %p43 = por %p41, %p42
      %p44 = scmp.ne.s32.totalorder %s33, %s34
      %p45 = scmp.eq.s32.totalorder %s25, 0
      %p46 = por %p44, %p45
      %p47 = scmp.ne.s32.totalorder %s33, %s34
      %p48 = scmp.eq.s32.totalorder %s26, 1
      %p49 = por %p47, %p48
      %p51 = scmp.ne.s32.totalorder %s34, %s50
      %p52 = scmp.eq.s32.totalorder %s26, 0
      %p53 = por %p51, %p52
      %s55 = sadd.s32 %s54, 1
      %p58 = scmp.eq.s32.totalorder %s20, 1
      %p59 = scmp.ne.s32.totalorder %s54, %s56
      %p60 = scmp.eq.s32.totalorder %s20, 0
      %p61 = por %p59, %p60
      %p62 = scmp.ne.s32.totalorder %s54, %s56
      %p63 = scmp.eq.s32.totalorder %s25, 1
      %p64 = por %p62, %p63
      %p65 = scmp.ne.s32.totalorder %s56, %s57
      %p66 = scmp.eq.s32.totalorder %s25, 0
      %p67 = por %p65, %p66
      %p68 = scmp.ne.s32.totalorder %s56, %s57
      %p69 = scmp.eq.s32.totalorder %s26, 1
      %p70 = por %p68, %p69
      %p72 = scmp.ne.s32.totalorder %s57, %s71
      %p73 = scmp.eq.s32.totalorder %s26, 0
      %p74 = por %p72, %p73
      %s76 = sadd.s32 %s75, 1
      %p79 = scmp.eq.s32.totalorder %s20, 1
      %p80 = scmp.ne.s32.totalorder %s75, %s77
      %p81 = scmp.eq.s32.totalorder %s20, 0
      %p82 = por %p80, %p81
      %p83 = scmp.ne.s32.totalorder %s75, %s77
      %p84 = scmp.eq.s32.totalorder %s25, 1
      %p85 = por %p83, %p84
      %p86 = scmp.ne.s32.totalorder %s77, %s78
      %p87 = scmp.eq.s32.totalorder %s25, 0
      %p88 = por %p86, %p87
      %p89 = scmp.ne.s32.totalorder %s77, %s78
      %p90 = scmp.eq.s32.totalorder %s26, 1
      %p91 = por %p89, %p90
      %p93 = scmp.ne.s32.totalorder %s78, %s92
      %p94 = scmp.eq.s32.totalorder %s26, 0
      %p95 = por %p93, %p94
      %s97 = sadd.s32 %s96, 1
      %p100 = scmp.eq.s32.totalorder %s20, 1
      %p101 = scmp.ne.s32.totalorder %s96, %s98
      %p102 = scmp.eq.s32.totalorder %s20, 0
      %p103 = por %p101, %p102
      %p104 = scmp.ne.s32.totalorder %s96, %s98
      %p105 = scmp.eq.s32.totalorder %s25, 1
      %p106 = por %p104, %p105
      %p107 = scmp.ne.s32.totalorder %s98, %s99
      %p108 = scmp.eq.s32.totalorder %s25, 0
      %p109 = por %p107, %p108
      %p110 = scmp.ne.s32.totalorder %s98, %s99
      %p111 = scmp.eq.s32.totalorder %s26, 1
      %p112 = por %p110, %p111
      %p114 = scmp.ne.s32.totalorder %s99, %s113
      %p115 = scmp.eq.s32.totalorder %s26, 0
      %p116 = por %p114, %p115
      %s118 = sadd.s32 %s117, 1
      %p121 = scmp.eq.s32.totalorder %s20, 1
      %p122 = scmp.ne.s32.totalorder %s117, %s119
      %p123 = scmp.eq.s32.totalorder %s20, 0
      %p124 = por %p122, %p123
      %p125 = scmp.ne.s32.totalorder %s117, %s119
      %p126 = scmp.eq.s32.totalorder %s25, 1
      %p127 = por %p125, %p126
      %p128 = scmp.ne.s32.totalorder %s119, %s120
      %p129 = scmp.eq.s32.totalorder %s25, 0
      %p130 = por %p128, %p129
      %p131 = scmp.ne.s32.totalorder %s119, %s120
      %p132 = scmp.eq.s32.totalorder %s26, 1
      %p133 = por %p131, %p132
      %p135 = scmp.ne.s32.totalorder %s120, %s134
      %p136 = scmp.eq.s32.totalorder %s26, 0
      %p137 = por %p135, %p136
      %s139 = sadd.s32 %s138, 1
      %p142 = scmp.eq.s32.totalorder %s20, 1
      %p143 = scmp.ne.s32.totalorder %s138, %s140
      %p144 = scmp.eq.s32.totalorder %s20, 0
      %p145 = por %p143, %p144
      %p146 = scmp.ne.s32.totalorder %s138, %s140
      %p147 = scmp.eq.s32.totalorder %s25, 1
      %p148 = por %p146, %p147
      %p149 = scmp.ne.s32.totalorder %s140, %s141
      %p150 = scmp.eq.s32.totalorder %s25, 0
      %p151 = por %p149, %p150
      %p152 = scmp.ne.s32.totalorder %s140, %s141
      %p153 = scmp.eq.s32.totalorder %s26, 1
      %p154 = por %p152, %p153
      %p156 = scmp.ne.s32.totalorder %s141, %s155
      %p157 = scmp.eq.s32.totalorder %s26, 0
      %p158 = por %p156, %p157
      %s160 = sadd.s32 %s159, 1
      %p163 = scmp.eq.s32.totalorder %s20, 1
      %p164 = scmp.ne.s32.totalorder %s159, %s161
      %p165 = scmp.eq.s32.totalorder %s20, 0
      %p166 = por %p164, %p165
      %p167 = scmp.ne.s32.totalorder %s159, %s161
      %p168 = scmp.eq.s32.totalorder %s25, 1
      %p169 = por %p167, %p168
      %p170 = scmp.ne.s32.totalorder %s161, %s162
      %p171 = scmp.eq.s32.totalorder %s25, 0
      %p172 = por %p170, %p171
      %p173 = scmp.ne.s32.totalorder %s161, %s162
      %p174 = scmp.eq.s32.totalorder %s26, 1
      %p175 = por %p173, %p174
      %p177 = scmp.ne.s32.totalorder %s162, %s176
      %p178 = scmp.eq.s32.totalorder %s26, 0
      %p179 = por %p177, %p178
      %s181 = sadd.s32 %s180, 1
      %p184 = scmp.eq.s32.totalorder %s20, 1
      %p185 = scmp.ne.s32.totalorder %s180, %s182
      %p186 = scmp.eq.s32.totalorder %s20, 0
      %p187 = por %p185, %p186
      %p188 = scmp.ne.s32.totalorder %s180, %s182
      %p189 = scmp.eq.s32.totalorder %s25, 1
      %p190 = por %p188, %p189
      %p191 = scmp.ne.s32.totalorder %s182, %s183
      %p192 = scmp.eq.s32.totalorder %s25, 0
      %p193 = por %p191, %p192
      %p194 = scmp.ne.s32.totalorder %s182, %s183
      %p195 = scmp.eq.s32.totalorder %s26, 1
      %p196 = por %p194, %p195
      %p198 = scmp.ne.s32.totalorder %s183, %s197
      %p199 = scmp.eq.s32.totalorder %s26, 0
      %p200 = por %p198, %p199
      %s202 = sadd.s32 %s201, 1
      %p205 = scmp.eq.s32.totalorder %s20, 1
      %p206 = scmp.ne.s32.totalorder %s201, %s203
      %p207 = scmp.eq.s32.totalorder %s20, 0
      %p208 = por %p206, %p207
      %p209 = scmp.ne.s32.totalorder %s201, %s203
      %p210 = scmp.eq.s32.totalorder %s25, 1
      %p211 = por %p209, %p210
      %p212 = scmp.ne.s32.totalorder %s203, %s204
      %p213 = scmp.eq.s32.totalorder %s25, 0
      %p214 = por %p212, %p213
      %p215 = scmp.ne.s32.totalorder %s203, %s204
      %p216 = scmp.eq.s32.totalorder %s26, 1
      %p217 = por %p215, %p216
      %p219 = scmp.ne.s32.totalorder %s204, %s218
      %p220 = scmp.eq.s32.totalorder %s26, 0
      %p221 = por %p219, %p220
      %s223 = sadd.s32 %s222, 1
      %p226 = scmp.eq.s32.totalorder %s20, 1
      %p227 = scmp.ne.s32.totalorder %s222, %s224
      %p228 = scmp.eq.s32.totalorder %s20, 0
      %p229 = por %p227, %p228
      %p230 = scmp.ne.s32.totalorder %s222, %s224
      %p231 = scmp.eq.s32.totalorder %s25, 1
      %p232 = por %p230, %p231
      %p233 = scmp.ne.s32.totalorder %s224, %s225
      %p234 = scmp.eq.s32.totalorder %s25, 0
      %p235 = por %p233, %p234
      %p236 = scmp.ne.s32.totalorder %s224, %s225
      %p237 = scmp.eq.s32.totalorder %s26, 1
      %p238 = por %p236, %p237
      %p240 = scmp.ne.s32.totalorder %s225, %s239
      %p241 = scmp.eq.s32.totalorder %s26, 0
      %p242 = por %p240, %p241
      %s244 = sadd.s32 %s243, 1
      %p247 = scmp.eq.s32.totalorder %s20, 1
      %p248 = scmp.ne.s32.totalorder %s243, %s245
      %p249 = scmp.eq.s32.totalorder %s20, 0
      %p250 = por %p248, %p249
      %p251 = scmp.ne.s32.totalorder %s243, %s245
      %p252 = scmp.eq.s32.totalorder %s25, 1
      %p253 = por %p251, %p252
      %p254 = scmp.ne.s32.totalorder %s245, %s246
      %p255 = scmp.eq.s32.totalorder %s25, 0
      %p256 = por %p254, %p255
      %p257 = scmp.ne.s32.totalorder %s245, %s246
      %p258 = scmp.eq.s32.totalorder %s26, 1
      %p259 = por %p257, %p258
      %p261 = scmp.ne.s32.totalorder %s246, %s260
      %p262 = scmp.eq.s32.totalorder %s26, 0
      %p263 = por %p261, %p262
      %s264 = ssub.s32 %s20, %s27
      %p265 = scmp.eq.s32.totalorder %s264, 0
      %s267 = sadd.s32 %s266, 1
      %s268 = scalar_select %p265, %s266, %s267
      %p271 = pneg %p265
      %p272 = scmp.eq.s32.totalorder %s20, 1
      %p273 = por %p271, %p272
      %p274 = scmp.ne.s32.totalorder %s266, %s269
      %p275 = scmp.eq.s32.totalorder %s20, 0
      %p276 = por %p274, %p275
      %p277 = scmp.ne.s32.totalorder %s266, %s269
      %p278 = scmp.eq.s32.totalorder %s25, 1
      %p279 = por %p277, %p278
      %p280 = scmp.ne.s32.totalorder %s269, %s270
      %p281 = scmp.eq.s32.totalorder %s25, 0
      %p282 = por %p280, %p281
      %p283 = scmp.ne.s32.totalorder %s269, %s270
      %p284 = scmp.eq.s32.totalorder %s26, 1
      %p285 = por %p283, %p284
      %p287 = scmp.ne.s32.totalorder %s270, %s286
      %p288 = scmp.eq.s32.totalorder %s26, 0
      %p289 = por %p287, %p288
      %p290 = scmp.le.s32.totalorder 1, %s20
      %p291 = scmp.lt.s32.totalorder %s20, 3
      %p292 = pnand %p290, %p291
      %p293 = pneg %p292
      // Predicated region
      $region9: #{tpu_custom_call.1} parent=5 // pred_check
        _
      $region10: #{tpu_custom_call.1} parent=5 // pred_check_branch
        %295 = sbr.rel (%p292) target = $region12
      $region11: #{tpu_custom_call.1} parent=5 // pred_region
        %s296 = ssub.s32 %s20, 1
        // Predicated region
        $region13: #{tpu_custom_call.1} parent=11 // pred_check
          %p297 = pneg %p67
        $region14: #{tpu_custom_call.1} parent=11 // pred_check_branch
          %299 = sbr.rel (%p297) target = $region16
        $region15: #{tpu_custom_call.1} parent=11 // pred_region
          _
        $region16: #{tpu_custom_call.1} parent=11 // pred_fallthru
          _
        // Predicated region
        $region17: #{tpu_custom_call.1} parent=11 // pred_check
          %p300 = pneg %p88
        $region18: #{tpu_custom_call.1} parent=11 // pred_check_branch
          %302 = sbr.rel (%p300) target = $region20
        $region19: #{tpu_custom_call.1} parent=11 // pred_region
          _
        $region20: #{tpu_custom_call.1} parent=11 // pred_fallthru
          _
        // Predicated region
        $region21: #{tpu_custom_call.1} parent=11 // pred_check
          %p303 = pneg %p109
        $region22: #{tpu_custom_call.1} parent=11 // pred_check_branch
          %305 = sbr.rel (%p303) target = $region24
        $region23: #{tpu_custom_call.1} parent=11 // pred_region
          _
        $region24: #{tpu_custom_call.1} parent=11 // pred_fallthru
          _
        // Predicated region
        $region25: #{tpu_custom_call.1} parent=11 // pred_check
          %p306 = pneg %p130
        $region26: #{tpu_custom_call.1} parent=11 // pred_check_branch
          %308 = sbr.rel (%p306) target = $region28
        $region27: #{tpu_custom_call.1} parent=11 // pred_region
          _
        $region28: #{tpu_custom_call.1} parent=11 // pred_fallthru
          _
        // Predicated region
        $region29: #{tpu_custom_call.1} parent=11 // pred_check
          %p309 = pneg %p151
        $region30: #{tpu_custom_call.1} parent=11 // pred_check_branch
          %311 = sbr.rel (%p309) target = $region32
        $region31: #{tpu_custom_call.1} parent=11 // pred_region
          _
        $region32: #{tpu_custom_call.1} parent=11 // pred_fallthru
          _
        // Predicated region
        $region33: #{tpu_custom_call.1} parent=11 // pred_check
          %p312 = pneg %p172
        $region34: #{tpu_custom_call.1} parent=11 // pred_check_branch
          %314 = sbr.rel (%p312) target = $region36
        $region35: #{tpu_custom_call.1} parent=11 // pred_region
          _
        $region36: #{tpu_custom_call.1} parent=11 // pred_fallthru
          _
        // Predicated region
        $region37: #{tpu_custom_call.1} parent=11 // pred_check
          %p315 = pneg %p193
        $region38: #{tpu_custom_call.1} parent=11 // pred_check_branch
          %317 = sbr.rel (%p315) target = $region40
        $region39: #{tpu_custom_call.1} parent=11 // pred_region
          _
        $region40: #{tpu_custom_call.1} parent=11 // pred_fallthru
          _
        // Predicated region
        $region41: #{tpu_custom_call.1} parent=11 // pred_check
          %p318 = pneg %p214
        $region42: #{tpu_custom_call.1} parent=11 // pred_check_branch
          %320 = sbr.rel (%p318) target = $region44
        $region43: #{tpu_custom_call.1} parent=11 // pred_region
          _
        $region44: #{tpu_custom_call.1} parent=11 // pred_fallthru
          _
        // Predicated region
        $region45: #{tpu_custom_call.1} parent=11 // pred_check
          %p321 = pneg %p235
        $region46: #{tpu_custom_call.1} parent=11 // pred_check_branch
          %323 = sbr.rel (%p321) target = $region48
        $region47: #{tpu_custom_call.1} parent=11 // pred_region
          _
        $region48: #{tpu_custom_call.1} parent=11 // pred_fallthru
          _
        // Predicated region
        $region49: #{tpu_custom_call.1} parent=11 // pred_check
          %p324 = pneg %p256
        $region50: #{tpu_custom_call.1} parent=11 // pred_check_branch
          %326 = sbr.rel (%p324) target = $region52
        $region51: #{tpu_custom_call.1} parent=11 // pred_region
          _
        $region52: #{tpu_custom_call.1} parent=11 // pred_fallthru
          _
      $region12: #{tpu_custom_call.1} parent=5 // pred_fallthru
        _
      %p327 = scmp.lt.s32.totalorder %s20, 2
      // Predicated region
      $region53: #{tpu_custom_call.1} parent=5 // pred_check
        %p328 = pneg %p327
      $region54: #{tpu_custom_call.1} parent=5 // pred_check_branch
        %330 = sbr.rel (%p328) target = $region56
      $region55: #{tpu_custom_call.1} parent=5 // pred_region
        // Predicated region
        $region57: #{tpu_custom_call.1} parent=55 // pred_check
          %p331 = pneg %p40
        $region58: #{tpu_custom_call.1} parent=55 // pred_check_branch
          %333 = sbr.rel (%p331) target = $region60
        $region59: #{tpu_custom_call.1} parent=55 // pred_region
          %p334 = scmp.lt.s32.totalorder %s20, 1
          %s335 = scalar_select %p334, %s20, 1
          %s336 = smul.addr %s335, 2
          %s337 = smul.addr %s336, 4
          %s338 = scalar_lea.vmem %s0, %s337
        $region60: #{tpu_custom_call.1} parent=55 // pred_fallthru
          _
      $region56: #{tpu_custom_call.1} parent=5 // pred_fallthru
        _
      %p339 = scmp.le.s32.totalorder 1, %s20
      %p340 = scmp.lt.s32.totalorder %s20, 3
      %p341 = pnand %p339, %p340
      %p342 = pneg %p341
      // Predicated region
      $region61: #{tpu_custom_call.1} parent=5 // pred_check
        _
      $region62: #{tpu_custom_call.1} parent=5 // pred_check_branch
        %344 = sbr.rel (%p341) target = $region64
      $region63: #{tpu_custom_call.1} parent=5 // pred_region
        %s345 = ssub.s32 %s20, 1
        %p346 = scmp.lt.s32.totalorder %s25, 1
        %s347 = scalar_select %p346, %s25, 1
        %s348 = smul.addr %s347, 2
        %s349 = smul.addr %s348, 4
        %s350 = scalar_lea.vmem %s0, %s349
        %p351 = pneg %p46
        %p352 = pneg %p43
        %p353 = pneg %p67
        %p354 = pneg %p64
        %p355 = pneg %p88
        %p356 = pneg %p85
        %p357 = pneg %p109
        %p358 = pneg %p106
        %p359 = pneg %p130
        %p360 = pneg %p127
        %p361 = pneg %p151
        %p362 = pneg %p148
        %p363 = pneg %p172
        %p364 = pneg %p169
        %p365 = pneg %p193
        %p366 = pneg %p190
        %p367 = pneg %p214
        %p368 = pneg %p211
        %p369 = pneg %p235
        %p370 = pneg %p232
        %p371 = pneg %p256
        %p372 = pneg %p253
        %p373 = pneg %p282
        %p374 = pneg %p279
        %s375 = sand.u32 %s269, 1
        %s376 = scalar_lea.sflag [#allocation3], %s375
        %s377 = sand.u32 %s269, 1
        %s378 = smul.addr %s377, 8
        %s379 = scalar_lea.vmem [#allocation2], %s378
        %p380 = scmp.lt.s32.totalorder %s25, 1
        %s381 = scalar_select %p380, %s25, 1
        %s382 = smul.addr %s381, 2
        %s383 = smul.addr %s382, 4
        %s384 = scalar_lea.vmem %s0, %s383
        %v385 = vld [vmem:[%s384] sm:$0xff]
        %v386 = vld [vmem:[%s1] sm:$0xff]
        %v387 = vld [vmem:[%s1 + $0x8] sm:$0xff]
        %v388 = vld [vmem:[%s1 + $0x10] sm:$0xff]
        %390 = vset.pattern.permute.xlu0 0
        %391 = vperm.xlu0 %390, %v386
        %v392 = vpop.permute.xlu0 %391
        %395 = vset.pattern.permute.xlu0 0
        %396 = vperm.xlu0 %395, %v387
        %v397 = vpop.permute.xlu0 %396
        %400 = vset.pattern.permute.xlu0 0
        %401 = vperm.xlu0 %400, %v388
        %v402 = vpop.permute.xlu0 %401
        %v405 = vperm.slane %v385, 0
        %v406 = vperm.slane %v385, 4
        %v409 = vperm.slane %v405, 0
        %v410 = vperm.slane %v406, 0
        %v411 = vmul.f32 %v392, %v409
        %v412 = vmul.f32 %v392, %v410
        %v413 = vmul.f32 %v397, %v409
        %v414 = vmul.f32 %v397, %v410
        %v415 = vmul.f32 %v402, %v409
        %v416 = vmul.f32 %v402, %v410
        %417 = vset.pattern.permute.xlu0 1
        %418 = vperm.xlu0 %417, %v386
        %v419 = vpop.permute.xlu0 %418
        %421 = vset.pattern.permute.xlu0 1
        %422 = vperm.xlu0 %421, %v387
        %v423 = vpop.permute.xlu0 %422
        %425 = vset.pattern.permute.xlu0 1
        %426 = vperm.xlu0 %425, %v388
        %v427 = vpop.permute.xlu0 %426
        %v429 = vperm.slane %v385, 1
        %v430 = vperm.slane %v385, 5
        %v433 = vperm.slane %v429, 1
        %v434 = vperm.slane %v430, 1
        %v435 = vmul.f32 %v419, %v433
        %v436 = vmul.f32 %v419, %v434
        %v437 = vmul.f32 %v423, %v433
        %v438 = vmul.f32 %v423, %v434
        %v439 = vmul.f32 %v427, %v433
        %v440 = vmul.f32 %v427, %v434
        %v441 = vadd.f32 %v411, %v435
        %v442 = vadd.f32 %v412, %v436
        %v443 = vadd.f32 %v413, %v437
        %v444 = vadd.f32 %v414, %v438
        %v445 = vadd.f32 %v415, %v439
        %v446 = vadd.f32 %v416, %v440
        %447 = vset.pattern.permute.xlu0 2
        %448 = vperm.xlu0 %447, %v386
        %v449 = vpop.permute.xlu0 %448
        %451 = vset.pattern.permute.xlu0 2
        %452 = vperm.xlu0 %451, %v387
        %v453 = vpop.permute.xlu0 %452
        %455 = vset.pattern.permute.xlu0 2
        %456 = vperm.xlu0 %455, %v388
        %v457 = vpop.permute.xlu0 %456
        %v459 = vperm.slane %v385, 2
        %v460 = vperm.slane %v385, 6
        %v463 = vperm.slane %v459, 2
        %v464 = vperm.slane %v460, 2
        %v465 = vmul.f32 %v449, %v463
        %v466 = vmul.f32 %v449, %v464
        %v467 = vmul.f32 %v453, %v463
        %v468 = vmul.f32 %v453, %v464
        %v469 = vmul.f32 %v457, %v463
        %v470 = vmul.f32 %v457, %v464
        %v471 = vadd.f32 %v441, %v465
        %v472 = vadd.f32 %v442, %v466
        %v473 = vadd.f32 %v443, %v467
        %v474 = vadd.f32 %v444, %v468
        %v475 = vadd.f32 %v445, %v469
        %v476 = vadd.f32 %v446, %v470
        %477 = vset.pattern.permute.xlu0 3
        %478 = vperm.xlu0 %477, %v386
        %v479 = vpop.permute.xlu0 %478
        %481 = vset.pattern.permute.xlu0 3
        %482 = vperm.xlu0 %481, %v387
        %v483 = vpop.permute.xlu0 %482
        %485 = vset.pattern.permute.xlu0 3
        %486 = vperm.xlu0 %485, %v388
        %v487 = vpop.permute.xlu0 %486
        %v489 = vperm.slane %v385, 3
        %v490 = vperm.slane %v385, 7
        %v493 = vperm.slane %v489, 3
        %v494 = vperm.slane %v490, 3
        %v495 = vmul.f32 %v479, %v493
        %v496 = vmul.f32 %v479, %v494
        %v497 = vmul.f32 %v483, %v493
        %v498 = vmul.f32 %v483, %v494
        %v499 = vmul.f32 %v487, %v493
        %v500 = vmul.f32 %v487, %v494
        %v501 = vadd.f32 %v471, %v495
        %v502 = vadd.f32 %v472, %v496
        %v503 = vadd.f32 %v473, %v497
        %v504 = vadd.f32 %v474, %v498
        %v505 = vadd.f32 %v475, %v499
        %v506 = vadd.f32 %v476, %v500
        %v507 = vld [vmem:[%s2] sm:$0xff]
        %v508 = vld [vmem:[%s2 + $0x8] sm:$0xff]
        %v509 = vld [vmem:[%s2 + $0x10] sm:$0xff]
        %511 = vset.pattern.permute.xlu0 0
        %512 = vperm.xlu0 %511, %v507
        %v513 = vpop.permute.xlu0 %512
        %516 = vset.pattern.permute.xlu0 0
        %517 = vperm.xlu0 %516, %v508
        %v518 = vpop.permute.xlu0 %517
        %521 = vset.pattern.permute.xlu0 0
        %522 = vperm.xlu0 %521, %v509
        %v523 = vpop.permute.xlu0 %522
        %v525 = vmul.f32 %v501, %v513
        %v526 = vmul.f32 %v502, %v513
        %v527 = vmul.f32 %v503, %v518
        %v528 = vmul.f32 %v504, %v518
        %v529 = vmul.f32 %v505, %v523
        %v530 = vmul.f32 %v506, %v523
        %v531 = vld [vmem:[%s3] sm:$0xff]
        %v532 = vld [vmem:[%s3 + $0x8] sm:$0xff]
        %v533 = vld [vmem:[%s3 + $0x10] sm:$0xff]
        %535 = vset.pattern.permute.xlu0 0
        %536 = vperm.xlu0 %535, %v531
        %v537 = vpop.permute.xlu0 %536
        %540 = vset.pattern.permute.xlu0 0
        %541 = vperm.xlu0 %540, %v532
        %v542 = vpop.permute.xlu0 %541
        %545 = vset.pattern.permute.xlu0 0
        %546 = vperm.xlu0 %545, %v533
        %v547 = vpop.permute.xlu0 %546
        %v549 = vadd.f32 %v525, %v537
        %v550 = vadd.f32 %v526, %v537
        %v551 = vadd.f32 %v527, %v542
        %v552 = vadd.f32 %v528, %v542
        %v553 = vadd.f32 %v529, %v547
        %v554 = vadd.f32 %v530, %v547
        %v555 = vmax.f32 %v549, 0.0
        %v556 = vmax.f32 %v550, 0.0
        %v557 = vmax.f32 %v551, 0.0
        %v558 = vmax.f32 %v552, 0.0
        %v559 = vmax.f32 %v553, 0.0
        %v560 = vmax.f32 %v554, 0.0
        %v561 = vld [vmem:[%s4] sm:$0xff]
        %v562 = vld [vmem:[%s4 + $0x8] sm:$0xff]
        %v563 = vld [vmem:[%s4 + $0x10] sm:$0xff]
        %564 = vrot.lane.b32.xlu0 %v555, 17
        %v565 = vpop.permute.xlu0 %564
        %566 = vrot.lane.b32.xlu0 %v557, 17
        %v567 = vpop.permute.xlu0 %566
        %568 = vrot.lane.b32.xlu0 %v559, 17
        %v569 = vpop.permute.xlu0 %568
        %570 = vrot.lane.b32.xlu0 %v556, 17
        %v571 = vpop.permute.xlu0 %570
        %572 = vrot.lane.b32.xlu0 %v558, 17
        %v573 = vpop.permute.xlu0 %572
        %574 = vrot.lane.b32.xlu0 %v560, 17
        %v575 = vpop.permute.xlu0 %574
        %v576 = vlaneseq
        %v577 = vand.u32 %v576, 127
        %vm578 = vcmp.lt.s32.totalorder %v577, 17
        %v579 = vsel %vm578, %v565, %v571
        %v580 = vsel %vm578, %v567, %v573
        %v581 = vsel %vm578, %v569, %v575
        %v582 = vsel %vm578, %v571, %v565
        %v583 = vsel %vm578, %v573, %v567
        %v584 = vsel %vm578, %v575, %v569
        %586 = vset.pattern.permute.xlu0 0
        %587 = vperm.xlu0 %586, %v561
        %v588 = vpop.permute.xlu0 %587
        %591 = vset.pattern.permute.xlu0 0
        %592 = vperm.xlu0 %591, %v562
        %v593 = vpop.permute.xlu0 %592
        %596 = vset.pattern.permute.xlu0 0
        %597 = vperm.xlu0 %596, %v563
        %v598 = vpop.permute.xlu0 %597
        %v600 = vmul.f32 %v582, %v588
        %v601 = vmul.f32 %v579, %v588
        %v602 = vmul.f32 %v583, %v593
        %v603 = vmul.f32 %v580, %v593
        %v604 = vmul.f32 %v584, %v598
        %v605 = vmul.f32 %v581, %v598
        %v606 = vld [vmem:[%s7] ss:$8 sm:$0x3]
        %v608 = vperm.slane %v606, 0
        %v609 = vperm.slane %v606, 1
        %v612 = vmul.f32 %v600, %v608
        %v613 = vmul.f32 %v601, %v609
        %v614 = vmul.f32 %v602, %v608
        %v615 = vmul.f32 %v603, %v609
        %v616 = vmul.f32 %v604, %v608
        %v617 = vmul.f32 %v605, %v609
        %v618 = vadd.f32 %v612, 0.0
        %v619 = vadd.f32 %v613, 0.0
        %v620 = vadd.f32 %v614, 0.0
        %v621 = vadd.f32 %v615, 0.0
        %v622 = vadd.f32 %v616, 0.0
        %v623 = vadd.f32 %v617, 0.0
        %624 = vrot.lane.b32.xlu0 %v555, 16
        %v625 = vpop.permute.xlu0 %624
        %626 = vrot.lane.b32.xlu0 %v557, 16
        %v627 = vpop.permute.xlu0 %626
        %628 = vrot.lane.b32.xlu0 %v559, 16
        %v629 = vpop.permute.xlu0 %628
        %630 = vrot.lane.b32.xlu0 %v556, 16
        %v631 = vpop.permute.xlu0 %630
        %632 = vrot.lane.b32.xlu0 %v558, 16
        %v633 = vpop.permute.xlu0 %632
        %634 = vrot.lane.b32.xlu0 %v560, 16
        %v635 = vpop.permute.xlu0 %634
        %vm636 = vcmp.lt.s32.totalorder %v577, 16
        %v637 = vsel %vm636, %v625, %v631
        %v638 = vsel %vm636, %v627, %v633
        %v639 = vsel %vm636, %v629, %v635
        %v640 = vsel %vm636, %v631, %v625
        %v641 = vsel %vm636, %v633, %v627
        %v642 = vsel %vm636, %v635, %v629
        %643 = vset.pattern.permute.xlu0 1
        %644 = vperm.xlu0 %643, %v561
        %v645 = vpop.permute.xlu0 %644
        %647 = vset.pattern.permute.xlu0 1
        %648 = vperm.xlu0 %647, %v562
        %v649 = vpop.permute.xlu0 %648
        %651 = vset.pattern.permute.xlu0 1
        %652 = vperm.xlu0 %651, %v563
        %v653 = vpop.permute.xlu0 %652
        %v655 = vmul.f32 %v640, %v645
        %v656 = vmul.f32 %v637, %v645
        %v657 = vmul.f32 %v641, %v649
        %v658 = vmul.f32 %v638, %v649
        %v659 = vmul.f32 %v642, %v653
        %v660 = vmul.f32 %v639, %v653
        %s661 = scalar_lea.vmem %s7, 1
        %v662 = vld [vmem:[%s661] ss:$8 sm:$0x3]
        %v664 = vperm.slane %v662, 0
        %v665 = vperm.slane %v662, 1
        %v668 = vmul.f32 %v655, %v664
        %v669 = vmul.f32 %v656, %v665
        %v670 = vmul.f32 %v657, %v664
        %v671 = vmul.f32 %v658, %v665
        %v672 = vmul.f32 %v659, %v664
        %v673 = vmul.f32 %v660, %v665
        %v674 = vadd.f32 %v618, %v668
        %v675 = vadd.f32 %v619, %v669
        %v676 = vadd.f32 %v620, %v670
        %v677 = vadd.f32 %v621, %v671
        %v678 = vadd.f32 %v622, %v672
        %v679 = vadd.f32 %v623, %v673
        %680 = vrot.lane.b32.xlu0 %v555, 15
        %v681 = vpop.permute.xlu0 %680
        %682 = vrot.lane.b32.xlu0 %v557, 15
        %v683 = vpop.permute.xlu0 %682
        %684 = vrot.lane.b32.xlu0 %v559, 15
        %v685 = vpop.permute.xlu0 %684
        %686 = vrot.lane.b32.xlu0 %v556, 15
        %v687 = vpop.permute.xlu0 %686
        %688 = vrot.lane.b32.xlu0 %v558, 15
        %v689 = vpop.permute.xlu0 %688
        %690 = vrot.lane.b32.xlu0 %v560, 15
        %v691 = vpop.permute.xlu0 %690
        %vm692 = vcmp.lt.s32.totalorder %v577, 15
        %v693 = vsel %vm692, %v681, %v687
        %v694 = vsel %vm692, %v683, %v689
        %v695 = vsel %vm692, %v685, %v691
        %v696 = vsel %vm692, %v687, %v681
        %v697 = vsel %vm692, %v689, %v683
        %v698 = vsel %vm692, %v691, %v685
        %699 = vset.pattern.permute.xlu0 2
        %700 = vperm.xlu0 %699, %v561
        %v701 = vpop.permute.xlu0 %700
        %703 = vset.pattern.permute.xlu0 2
        %704 = vperm.xlu0 %703, %v562
        %v705 = vpop.permute.xlu0 %704
        %707 = vset.pattern.permute.xlu0 2
        %708 = vperm.xlu0 %707, %v563
        %v709 = vpop.permute.xlu0 %708
        %v711 = vmul.f32 %v696, %v701
        %v712 = vmul.f32 %v693, %v701
        %v713 = vmul.f32 %v697, %v705
        %v714 = vmul.f32 %v694, %v705
        %v715 = vmul.f32 %v698, %v709
        %v716 = vmul.f32 %v695, %v709
        %s717 = scalar_lea.vmem %s7, 2
        %v718 = vld [vmem:[%s717] ss:$8 sm:$0x3]
        %v720 = vperm.slane %v718, 0
        %v721 = vperm.slane %v718, 1
        %v724 = vmul.f32 %v711, %v720
        %v725 = vmul.f32 %v712, %v721
        %v726 = vmul.f32 %v713, %v720
        %v727 = vmul.f32 %v714, %v721
        %v728 = vmul.f32 %v715, %v720
        %v729 = vmul.f32 %v716, %v721
        %v730 = vadd.f32 %v674, %v724
        %v731 = vadd.f32 %v675, %v725
        %v732 = vadd.f32 %v676, %v726
        %v733 = vadd.f32 %v677, %v727
        %v734 = vadd.f32 %v678, %v728
        %v735 = vadd.f32 %v679, %v729
        %736 = vrot.lane.b32.xlu0 %v555, 1
        %v737 = vpop.permute.xlu0 %736
        %738 = vrot.lane.b32.xlu0 %v557, 1
        %v739 = vpop.permute.xlu0 %738
        %740 = vrot.lane.b32.xlu0 %v559, 1
        %v741 = vpop.permute.xlu0 %740
        %742 = vrot.lane.b32.xlu0 %v556, 1
        %v743 = vpop.permute.xlu0 %742
        %744 = vrot.lane.b32.xlu0 %v558, 1
        %v745 = vpop.permute.xlu0 %744
        %746 = vrot.lane.b32.xlu0 %v560, 1
        %v747 = vpop.permute.xlu0 %746
        %vm748 = vcmp.lt.s32.totalorder %v577, 1
        %v749 = vsel %vm748, %v737, %v743
        %v750 = vsel %vm748, %v739, %v745
        %v751 = vsel %vm748, %v741, %v747
        %v752 = vsel %vm748, %v743, %v737
        %v753 = vsel %vm748, %v745, %v739
        %v754 = vsel %vm748, %v747, %v741
        %755 = vset.pattern.permute.xlu0 3
        %756 = vperm.xlu0 %755, %v561
        %v757 = vpop.permute.xlu0 %756
        %759 = vset.pattern.permute.xlu0 3
        %760 = vperm.xlu0 %759, %v562
        %v761 = vpop.permute.xlu0 %760
        %763 = vset.pattern.permute.xlu0 3
        %764 = vperm.xlu0 %763, %v563
        %v765 = vpop.permute.xlu0 %764
        %v767 = vmul.f32 %v752, %v757
        %v768 = vmul.f32 %v749, %v757
        %v769 = vmul.f32 %v753, %v761
        %v770 = vmul.f32 %v750, %v761
        %v771 = vmul.f32 %v754, %v765
        %v772 = vmul.f32 %v751, %v765
        %s773 = scalar_lea.vmem %s7, 3
        %v774 = vld [vmem:[%s773] ss:$8 sm:$0x3]
        %v776 = vperm.slane %v774, 0
        %v777 = vperm.slane %v774, 1
        %v780 = vmul.f32 %v767, %v776
        %v781 = vmul.f32 %v768, %v777
        %v782 = vmul.f32 %v769, %v776
        %v783 = vmul.f32 %v770, %v777
        %v784 = vmul.f32 %v771, %v776
        %v785 = vmul.f32 %v772, %v777
        %v786 = vadd.f32 %v730, %v780
        %v787 = vadd.f32 %v731, %v781
        %v788 = vadd.f32 %v732, %v782
        %v789 = vadd.f32 %v733, %v783
        %v790 = vadd.f32 %v734, %v784
        %v791 = vadd.f32 %v735, %v785
        %792 = vset.pattern.permute.xlu0 4
        %793 = vperm.xlu0 %792, %v561
        %v794 = vpop.permute.xlu0 %793
        %796 = vset.pattern.permute.xlu0 4
        %797 = vperm.xlu0 %796, %v562
        %v798 = vpop.permute.xlu0 %797
        %800 = vset.pattern.permute.xlu0 4
        %801 = vperm.xlu0 %800, %v563
        %v802 = vpop.permute.xlu0 %801
        %v804 = vmul.f32 %v555, %v794
        %v805 = vmul.f32 %v556, %v794
        %v806 = vmul.f32 %v557, %v798
        %v807 = vmul.f32 %v558, %v798
        %v808 = vmul.f32 %v559, %v802
        %v809 = vmul.f32 %v560, %v802
        %v810 = vadd.f32 %v786, %v804
        %v811 = vadd.f32 %v787, %v805
        %v812 = vadd.f32 %v788, %v806
        %v813 = vadd.f32 %v789, %v807
        %v814 = vadd.f32 %v790, %v808
        %v815 = vadd.f32 %v791, %v809
        %816 = vrot.lane.b32.xlu0 %v555, 127
        %v817 = vpop.permute.xlu0 %816
        %818 = vrot.lane.b32.xlu0 %v557, 127
        %v819 = vpop.permute.xlu0 %818
        %820 = vrot.lane.b32.xlu0 %v559, 127
        %v821 = vpop.permute.xlu0 %820
        %822 = vrot.lane.b32.xlu0 %v556, 127
        %v823 = vpop.permute.xlu0 %822
        %824 = vrot.lane.b32.xlu0 %v558, 127
        %v825 = vpop.permute.xlu0 %824
        %826 = vrot.lane.b32.xlu0 %v560, 127
        %v827 = vpop.permute.xlu0 %826
        %vm828 = vcmp.lt.s32.totalorder %v577, 127
        %v829 = vsel %vm828, %v817, %v823
        %v830 = vsel %vm828, %v819, %v825
        %v831 = vsel %vm828, %v821, %v827
        %v832 = vsel %vm828, %v823, %v817
        %v833 = vsel %vm828, %v825, %v819
        %v834 = vsel %vm828, %v827, %v821
        %835 = vset.pattern.permute.xlu0 5
        %836 = vperm.xlu0 %835, %v561
        %v837 = vpop.permute.xlu0 %836
        %839 = vset.pattern.permute.xlu0 5
        %840 = vperm.xlu0 %839, %v562
        %v841 = vpop.permute.xlu0 %840
        %843 = vset.pattern.permute.xlu0 5
        %844 = vperm.xlu0 %843, %v563
        %v845 = vpop.permute.xlu0 %844
        %v847 = vmul.f32 %v829, %v837
        %v848 = vmul.f32 %v832, %v837
        %v849 = vmul.f32 %v830, %v841
        %v850 = vmul.f32 %v833, %v841
        %v851 = vmul.f32 %v831, %v845
        %v852 = vmul.f32 %v834, %v845
        %s853 = scalar_lea.vmem %s7, 5
        %v854 = vld [vmem:[%s853] ss:$8 sm:$0x3]
        %v856 = vperm.slane %v854, 0
        %v857 = vperm.slane %v854, 1
        %v860 = vmul.f32 %v847, %v856
        %v861 = vmul.f32 %v848, %v857
        %v862 = vmul.f32 %v849, %v856
        %v863 = vmul.f32 %v850, %v857
        %v864 = vmul.f32 %v851, %v856
        %v865 = vmul.f32 %v852, %v857
        %v866 = vadd.f32 %v810, %v860
        %v867 = vadd.f32 %v811, %v861
        %v868 = vadd.f32 %v812, %v862
        %v869 = vadd.f32 %v813, %v863
        %v870 = vadd.f32 %v814, %v864
        %v871 = vadd.f32 %v815, %v865
        %872 = vrot.lane.b32.xlu0 %v555, 113
        %v873 = vpop.permute.xlu0 %872
        %874 = vrot.lane.b32.xlu0 %v557, 113
        %v875 = vpop.permute.xlu0 %874
        %876 = vrot.lane.b32.xlu0 %v559, 113
        %v877 = vpop.permute.xlu0 %876
        %878 = vrot.lane.b32.xlu0 %v556, 113
        %v879 = vpop.permute.xlu0 %878
        %880 = vrot.lane.b32.xlu0 %v558, 113
        %v881 = vpop.permute.xlu0 %880
        %882 = vrot.lane.b32.xlu0 %v560, 113
        %v883 = vpop.permute.xlu0 %882
        %vm884 = vcmp.lt.s32.totalorder %v577, 113
        %v885 = vsel %vm884, %v873, %v879
        %v886 = vsel %vm884, %v875, %v881
        %v887 = vsel %vm884, %v877, %v883
        %v888 = vsel %vm884, %v879, %v873
        %v889 = vsel %vm884, %v881, %v875
        %v890 = vsel %vm884, %v883, %v877
        %891 = vset.pattern.permute.xlu0 6
        %892 = vperm.xlu0 %891, %v561
        %v893 = vpop.permute.xlu0 %892
        %895 = vset.pattern.permute.xlu0 6
        %896 = vperm.xlu0 %895, %v562
        %v897 = vpop.permute.xlu0 %896
        %899 = vset.pattern.permute.xlu0 6
        %900 = vperm.xlu0 %899, %v563
        %v901 = vpop.permute.xlu0 %900
        %v903 = vmul.f32 %v885, %v893
        %v904 = vmul.f32 %v888, %v893
        %v905 = vmul.f32 %v886, %v897
        %v906 = vmul.f32 %v889, %v897
        %v907 = vmul.f32 %v887, %v901
        %v908 = vmul.f32 %v890, %v901
        %s909 = scalar_lea.vmem %s7, 6
        %v910 = vld [vmem:[%s909] ss:$8 sm:$0x3]
        %v912 = vperm.slane %v910, 0
        %v913 = vperm.slane %v910, 1
        %v916 = vmul.f32 %v903, %v912
        %v917 = vmul.f32 %v904, %v913
        %v918 = vmul.f32 %v905, %v912
        %v919 = vmul.f32 %v906, %v913
        %v920 = vmul.f32 %v907, %v912
        %v921 = vmul.f32 %v908, %v913
        %v922 = vadd.f32 %v866, %v916
        %v923 = vadd.f32 %v867, %v917
        %v924 = vadd.f32 %v868, %v918
        %v925 = vadd.f32 %v869, %v919
        %v926 = vadd.f32 %v870, %v920
        %v927 = vadd.f32 %v871, %v921
        %928 = vrot.lane.b32.xlu0 %v555, 112
        %v929 = vpop.permute.xlu0 %928
        %930 = vrot.lane.b32.xlu0 %v557, 112
        %v931 = vpop.permute.xlu0 %930
        %932 = vrot.lane.b32.xlu0 %v559, 112
        %v933 = vpop.permute.xlu0 %932
        %934 = vrot.lane.b32.xlu0 %v556, 112
        %v935 = vpop.permute.xlu0 %934
        %936 = vrot.lane.b32.xlu0 %v558, 112
        %v937 = vpop.permute.xlu0 %936
        %938 = vrot.lane.b32.xlu0 %v560, 112
        %v939 = vpop.permute.xlu0 %938
        %vm940 = vcmp.lt.s32.totalorder %v577, 112
        %v941 = vsel %vm940, %v929, %v935
        %v942 = vsel %vm940, %v931, %v937
        %v943 = vsel %vm940, %v933, %v939
        %v944 = vsel %vm940, %v935, %v929
        %v945 = vsel %vm940, %v937, %v931
        %v946 = vsel %vm940, %v939, %v933
        %947 = vset.pattern.permute.xlu0 7
        %948 = vperm.xlu0 %947, %v561
        %v949 = vpop.permute.xlu0 %948
        %951 = vset.pattern.permute.xlu0 7
        %952 = vperm.xlu0 %951, %v562
        %v953 = vpop.permute.xlu0 %952
        %955 = vset.pattern.permute.xlu0 7
        %956 = vperm.xlu0 %955, %v563
        %v957 = vpop.permute.xlu0 %956
        %v959 = vmul.f32 %v941, %v949
        %v960 = vmul.f32 %v944, %v949
        %v961 = vmul.f32 %v942, %v953
        %v962 = vmul.f32 %v945, %v953
        %v963 = vmul.f32 %v943, %v957
        %v964 = vmul.f32 %v946, %v957
        %s965 = scalar_lea.vmem %s7, 7
        %v966 = vld [vmem:[%s965] ss:$8 sm:$0x3]
        %v968 = vperm.slane %v966, 0
        %v969 = vperm.slane %v966, 1
        %v972 = vmul.f32 %v959, %v968
        %v973 = vmul.f32 %v960, %v969
        %v974 = vmul.f32 %v961, %v968
        %v975 = vmul.f32 %v962, %v969
        %v976 = vmul.f32 %v963, %v968
        %v977 = vmul.f32 %v964, %v969
        %v978 = vadd.f32 %v922, %v972
        %v979 = vadd.f32 %v923, %v973
        %v980 = vadd.f32 %v924, %v974
        %v981 = vadd.f32 %v925, %v975
        %v982 = vadd.f32 %v926, %v976
        %v983 = vadd.f32 %v927, %v977
        %984 = vrot.lane.b32.xlu0 %v555, 111
        %v985 = vpop.permute.xlu0 %984
        %986 = vrot.lane.b32.xlu0 %v557, 111
        %v987 = vpop.permute.xlu0 %986
        %988 = vrot.lane.b32.xlu0 %v559, 111
        %v989 = vpop.permute.xlu0 %988
        %990 = vrot.lane.b32.xlu0 %v556, 111
        %v991 = vpop.permute.xlu0 %990
        %992 = vrot.lane.b32.xlu0 %v558, 111
        %v993 = vpop.permute.xlu0 %992
        %994 = vrot.lane.b32.xlu0 %v560, 111
        %v995 = vpop.permute.xlu0 %994
        %vm996 = vcmp.lt.s32.totalorder %v577, 111
        %v997 = vsel %vm996, %v985, %v991
        %v998 = vsel %vm996, %v987, %v993
        %v999 = vsel %vm996, %v989, %v995
        %v1000 = vsel %vm996, %v991, %v985
        %v1001 = vsel %vm996, %v993, %v987
        %v1002 = vsel %vm996, %v995, %v989
        %1003 = vset.pattern.permute.xlu0 8
        %1004 = vperm.xlu0 %1003, %v561
        %v1005 = vpop.permute.xlu0 %1004
        %1007 = vset.pattern.permute.xlu0 8
        %1008 = vperm.xlu0 %1007, %v562
        %v1009 = vpop.permute.xlu0 %1008
        %1011 = vset.pattern.permute.xlu0 8
        %1012 = vperm.xlu0 %1011, %v563
        %v1013 = vpop.permute.xlu0 %1012
        %v1015 = vmul.f32 %v997, %v1005
        %v1016 = vmul.f32 %v1000, %v1005
        %v1017 = vmul.f32 %v998, %v1009
        %v1018 = vmul.f32 %v1001, %v1009
        %v1019 = vmul.f32 %v999, %v1013
        %v1020 = vmul.f32 %v1002, %v1013
        %s1021 = scalar_lea.vmem %s7, 16
        %v1022 = vld [vmem:[%s1021] ss:$8 sm:$0x3]
        %v1024 = vperm.slane %v1022, 0
        %v1025 = vperm.slane %v1022, 1
        %v1028 = vmul.f32 %v1015, %v1024
        %v1029 = vmul.f32 %v1016, %v1025
        %v1030 = vmul.f32 %v1017, %v1024
        %v1031 = vmul.f32 %v1018, %v1025
        %v1032 = vmul.f32 %v1019, %v1024
        %v1033 = vmul.f32 %v1020, %v1025
        %v1034 = vadd.f32 %v978, %v1028
        %v1035 = vadd.f32 %v979, %v1029
        %v1036 = vadd.f32 %v980, %v1030
        %v1037 = vadd.f32 %v981, %v1031
        %v1038 = vadd.f32 %v982, %v1032
        %v1039 = vadd.f32 %v983, %v1033
        %v1040 = vld [vmem:[%s5] sm:$0xff]
        %v1041 = vld [vmem:[%s5 + $0x8] sm:$0xff]
        %v1042 = vld [vmem:[%s5 + $0x10] sm:$0xff]
        %1044 = vset.pattern.permute.xlu0 0
        %1045 = vperm.xlu0 %1044, %v1040
        %v1046 = vpop.permute.xlu0 %1045
        %1049 = vset.pattern.permute.xlu0 0
        %1050 = vperm.xlu0 %1049, %v1041
        %v1051 = vpop.permute.xlu0 %1050
        %1054 = vset.pattern.permute.xlu0 0
        %1055 = vperm.xlu0 %1054, %v1042
        %v1056 = vpop.permute.xlu0 %1055
        %v1058 = vmul.f32 %v1034, %v1046
        %v1059 = vmul.f32 %v1035, %v1046
        %v1060 = vmul.f32 %v1036, %v1051
        %v1061 = vmul.f32 %v1037, %v1051
        %v1062 = vmul.f32 %v1038, %v1056
        %v1063 = vmul.f32 %v1039, %v1056
        %v1064 = vld [vmem:[%s6] sm:$0xff]
        %v1065 = vld [vmem:[%s6 + $0x8] sm:$0xff]
        %v1066 = vld [vmem:[%s6 + $0x10] sm:$0xff]
        %1068 = vset.pattern.permute.xlu0 0
        %1069 = vperm.xlu0 %1068, %v1064
        %v1070 = vpop.permute.xlu0 %1069
        %1073 = vset.pattern.permute.xlu0 0
        %1074 = vperm.xlu0 %1073, %v1065
        %v1075 = vpop.permute.xlu0 %1074
        %1078 = vset.pattern.permute.xlu0 0
        %1079 = vperm.xlu0 %1078, %v1066
        %v1080 = vpop.permute.xlu0 %1079
        %v1082 = vadd.f32 %v1058, %v1070
        %v1083 = vadd.f32 %v1059, %v1070
        %v1084 = vadd.f32 %v1060, %v1075
        %v1085 = vadd.f32 %v1061, %v1075
        %v1086 = vadd.f32 %v1062, %v1080
        %v1087 = vadd.f32 %v1063, %v1080
        %v1088 = vmax.f32 %v1082, 0.0
        %v1089 = vmax.f32 %v1083, 0.0
        %v1090 = vmax.f32 %v1084, 0.0
        %v1091 = vmax.f32 %v1085, 0.0
        %v1092 = vmax.f32 %v1086, 0.0
        %v1093 = vmax.f32 %v1087, 0.0
        %v1094 = vld [vmem:[%s8] sm:$0xf]
        %1096 = vset.pattern.permute.xlu0 0
        %1097 = vperm.xlu0 %1096, %v1094
        %v1098 = vpop.permute.xlu0 %1097
        %v1100 = vperm.slane %v1088, 0
        %v1101 = vperm.slane %v1089, 0
        %v1102 = vmul.f32 %v1098, %v1100
        %v1103 = vmul.f32 %v1098, %v1101
        %1104 = vset.pattern.permute.xlu0 1
        %1105 = vperm.xlu0 %1104, %v1094
        %v1106 = vpop.permute.xlu0 %1105
        %v1108 = vperm.slane %v1088, 1
        %v1109 = vperm.slane %v1089, 1
        %v1110 = vmul.f32 %v1106, %v1108
        %v1111 = vmul.f32 %v1106, %v1109
        %v1112 = vadd.f32 %v1102, %v1110
        %v1113 = vadd.f32 %v1103, %v1111
        %1114 = vset.pattern.permute.xlu0 2
        %1115 = vperm.xlu0 %1114, %v1094
        %v1116 = vpop.permute.xlu0 %1115
        %v1118 = vperm.slane %v1088, 2
        %v1119 = vperm.slane %v1089, 2
        %v1120 = vmul.f32 %v1116, %v1118
        %v1121 = vmul.f32 %v1116, %v1119
        %v1122 = vadd.f32 %v1112, %v1120
        %v1123 = vadd.f32 %v1113, %v1121
        %1124 = vset.pattern.permute.xlu0 3
        %1125 = vperm.xlu0 %1124, %v1094
        %v1126 = vpop.permute.xlu0 %1125
        %v1128 = vperm.slane %v1088, 3
        %v1129 = vperm.slane %v1089, 3
        %v1130 = vmul.f32 %v1126, %v1128
        %v1131 = vmul.f32 %v1126, %v1129
        %v1132 = vadd.f32 %v1122, %v1130
        %v1133 = vadd.f32 %v1123, %v1131
        %1134 = vset.pattern.permute.xlu0 4
        %1135 = vperm.xlu0 %1134, %v1094
        %v1136 = vpop.permute.xlu0 %1135
        %v1138 = vperm.slane %v1088, 4
        %v1139 = vperm.slane %v1089, 4
        %v1140 = vmul.f32 %v1136, %v1138
        %v1141 = vmul.f32 %v1136, %v1139
        %v1142 = vadd.f32 %v1132, %v1140
        %v1143 = vadd.f32 %v1133, %v1141
        %1144 = vset.pattern.permute.xlu0 5
        %1145 = vperm.xlu0 %1144, %v1094
        %v1146 = vpop.permute.xlu0 %1145
        %v1148 = vperm.slane %v1088, 5
        %v1149 = vperm.slane %v1089, 5
        %v1150 = vmul.f32 %v1146, %v1148
        %v1151 = vmul.f32 %v1146, %v1149
        %v1152 = vadd.f32 %v1142, %v1150
        %v1153 = vadd.f32 %v1143, %v1151
        %1154 = vset.pattern.permute.xlu0 6
        %1155 = vperm.xlu0 %1154, %v1094
        %v1156 = vpop.permute.xlu0 %1155
        %v1158 = vperm.slane %v1088, 6
        %v1159 = vperm.slane %v1089, 6
        %v1160 = vmul.f32 %v1156, %v1158
        %v1161 = vmul.f32 %v1156, %v1159
        %v1162 = vadd.f32 %v1152, %v1160
        %v1163 = vadd.f32 %v1153, %v1161
        %1164 = vset.pattern.permute.xlu0 7
        %1165 = vperm.xlu0 %1164, %v1094
        %v1166 = vpop.permute.xlu0 %1165
        %v1168 = vperm.slane %v1088, 7
        %v1169 = vperm.slane %v1089, 7
        %v1170 = vmul.f32 %v1166, %v1168
        %v1171 = vmul.f32 %v1166, %v1169
        %v1172 = vadd.f32 %v1162, %v1170
        %v1173 = vadd.f32 %v1163, %v1171
        %1174 = vset.pattern.permute.xlu0 8
        %1175 = vperm.xlu0 %1174, %v1094
        %v1176 = vpop.permute.xlu0 %1175
        %v1178 = vperm.slane %v1090, 0
        %v1179 = vperm.slane %v1091, 0
        %v1180 = vmul.f32 %v1176, %v1178
        %v1181 = vmul.f32 %v1176, %v1179
        %v1182 = vadd.f32 %v1172, %v1180
        %v1183 = vadd.f32 %v1173, %v1181
        %1184 = vset.pattern.permute.xlu0 9
        %1185 = vperm.xlu0 %1184, %v1094
        %v1186 = vpop.permute.xlu0 %1185
        %v1188 = vperm.slane %v1090, 1
        %v1189 = vperm.slane %v1091, 1
        %v1190 = vmul.f32 %v1186, %v1188
        %v1191 = vmul.f32 %v1186, %v1189
        %v1192 = vadd.f32 %v1182, %v1190
        %v1193 = vadd.f32 %v1183, %v1191
        %1194 = vset.pattern.permute.xlu0 10
        %1195 = vperm.xlu0 %1194, %v1094
        %v1196 = vpop.permute.xlu0 %1195
        %v1198 = vperm.slane %v1090, 2
        %v1199 = vperm.slane %v1091, 2
        %v1200 = vmul.f32 %v1196, %v1198
        %v1201 = vmul.f32 %v1196, %v1199
        %v1202 = vadd.f32 %v1192, %v1200
        %v1203 = vadd.f32 %v1193, %v1201
        %1204 = vset.pattern.permute.xlu0 11
        %1205 = vperm.xlu0 %1204, %v1094
        %v1206 = vpop.permute.xlu0 %1205
        %v1208 = vperm.slane %v1090, 3
        %v1209 = vperm.slane %v1091, 3
        %v1210 = vmul.f32 %v1206, %v1208
        %v1211 = vmul.f32 %v1206, %v1209
        %v1212 = vadd.f32 %v1202, %v1210
        %v1213 = vadd.f32 %v1203, %v1211
        %1214 = vset.pattern.permute.xlu0 12
        %1215 = vperm.xlu0 %1214, %v1094
        %v1216 = vpop.permute.xlu0 %1215
        %v1218 = vperm.slane %v1090, 4
        %v1219 = vperm.slane %v1091, 4
        %v1220 = vmul.f32 %v1216, %v1218
        %v1221 = vmul.f32 %v1216, %v1219
        %v1222 = vadd.f32 %v1212, %v1220
        %v1223 = vadd.f32 %v1213, %v1221
        %1224 = vset.pattern.permute.xlu0 13
        %1225 = vperm.xlu0 %1224, %v1094
        %v1226 = vpop.permute.xlu0 %1225
        %v1228 = vperm.slane %v1090, 5
        %v1229 = vperm.slane %v1091, 5
        %v1230 = vmul.f32 %v1226, %v1228
        %v1231 = vmul.f32 %v1226, %v1229
        %v1232 = vadd.f32 %v1222, %v1230
        %v1233 = vadd.f32 %v1223, %v1231
        %1234 = vset.pattern.permute.xlu0 14
        %1235 = vperm.xlu0 %1234, %v1094
        %v1236 = vpop.permute.xlu0 %1235
        %v1238 = vperm.slane %v1090, 6
        %v1239 = vperm.slane %v1091, 6
        %v1240 = vmul.f32 %v1236, %v1238
        %v1241 = vmul.f32 %v1236, %v1239
        %v1242 = vadd.f32 %v1232, %v1240
        %v1243 = vadd.f32 %v1233, %v1241
        %1244 = vset.pattern.permute.xlu0 15
        %1245 = vperm.xlu0 %1244, %v1094
        %v1246 = vpop.permute.xlu0 %1245
        %v1248 = vperm.slane %v1090, 7
        %v1249 = vperm.slane %v1091, 7
        %v1250 = vmul.f32 %v1246, %v1248
        %v1251 = vmul.f32 %v1246, %v1249
        %v1252 = vadd.f32 %v1242, %v1250
        %v1253 = vadd.f32 %v1243, %v1251
        %1254 = vset.pattern.permute.xlu0 16
        %1255 = vperm.xlu0 %1254, %v1094
        %v1256 = vpop.permute.xlu0 %1255
        %v1258 = vperm.slane %v1092, 0
        %v1259 = vperm.slane %v1093, 0
        %v1260 = vmul.f32 %v1256, %v1258
        %v1261 = vmul.f32 %v1256, %v1259
        %v1262 = vadd.f32 %v1252, %v1260
        %v1263 = vadd.f32 %v1253, %v1261
        %1264 = vset.pattern.permute.xlu0 17
        %1265 = vperm.xlu0 %1264, %v1094
        %v1266 = vpop.permute.xlu0 %1265
        %v1268 = vperm.slane %v1092, 1
        %v1269 = vperm.slane %v1093, 1
        %v1270 = vmul.f32 %v1266, %v1268
        %v1271 = vmul.f32 %v1266, %v1269
        %v1272 = vadd.f32 %v1262, %v1270
        %v1273 = vadd.f32 %v1263, %v1271
        %1274 = vset.pattern.permute.xlu0 18
        %1275 = vperm.xlu0 %1274, %v1094
        %v1276 = vpop.permute.xlu0 %1275
        %v1278 = vperm.slane %v1092, 2
        %v1279 = vperm.slane %v1093, 2
        %v1280 = vmul.f32 %v1276, %v1278
        %v1281 = vmul.f32 %v1276, %v1279
        %v1282 = vadd.f32 %v1272, %v1280
        %v1283 = vadd.f32 %v1273, %v1281
        %1284 = vset.pattern.permute.xlu0 19
        %1285 = vperm.xlu0 %1284, %v1094
        %v1286 = vpop.permute.xlu0 %1285
        %v1288 = vperm.slane %v1092, 3
        %v1289 = vperm.slane %v1093, 3
        %v1290 = vmul.f32 %v1286, %v1288
        %v1291 = vmul.f32 %v1286, %v1289
        %v1292 = vadd.f32 %v1282, %v1290
        %v1293 = vadd.f32 %v1283, %v1291
        %1294 = vset.pattern.permute.xlu0 20
        %1295 = vperm.xlu0 %1294, %v1094
        %v1296 = vpop.permute.xlu0 %1295
        %v1298 = vperm.slane %v1092, 4
        %v1299 = vperm.slane %v1093, 4
        %v1300 = vmul.f32 %v1296, %v1298
        %v1301 = vmul.f32 %v1296, %v1299
        %v1302 = vadd.f32 %v1292, %v1300
        %v1303 = vadd.f32 %v1293, %v1301
        %1304 = vset.pattern.permute.xlu0 21
        %1305 = vperm.xlu0 %1304, %v1094
        %v1306 = vpop.permute.xlu0 %1305
        %v1308 = vperm.slane %v1092, 5
        %v1309 = vperm.slane %v1093, 5
        %v1310 = vmul.f32 %v1306, %v1308
        %v1311 = vmul.f32 %v1306, %v1309
        %v1312 = vadd.f32 %v1302, %v1310
        %v1313 = vadd.f32 %v1303, %v1311
        %1314 = vset.pattern.permute.xlu0 22
        %1315 = vperm.xlu0 %1314, %v1094
        %v1316 = vpop.permute.xlu0 %1315
        %v1318 = vperm.slane %v1092, 6
        %v1319 = vperm.slane %v1093, 6
        %v1320 = vmul.f32 %v1316, %v1318
        %v1321 = vmul.f32 %v1316, %v1319
        %v1322 = vadd.f32 %v1312, %v1320
        %v1323 = vadd.f32 %v1313, %v1321
        %1324 = vset.pattern.permute.xlu0 23
        %1325 = vperm.xlu0 %1324, %v1094
        %v1326 = vpop.permute.xlu0 %1325
        %v1328 = vperm.slane %v1092, 7
        %v1329 = vperm.slane %v1093, 7
        %v1330 = vmul.f32 %v1326, %v1328
        %v1331 = vmul.f32 %v1326, %v1329
        %v1332 = vadd.f32 %v1322, %v1330
        %v1333 = vadd.f32 %v1323, %v1331
        %v1334 = vld [vmem:[%s9] sm:$0xf]
        %1336 = vset.pattern.permute.xlu0 0
        %1337 = vperm.xlu0 %1336, %v1334
        %v1338 = vpop.permute.xlu0 %1337
        %v1340 = vmul.f32 %v1332, %v1338
        %v1341 = vmul.f32 %v1333, %v1338
        %v1342 = vld [vmem:[%s10] sm:$0xf]
        %1344 = vset.pattern.permute.xlu0 0
        %1345 = vperm.xlu0 %1344, %v1342
        %v1346 = vpop.permute.xlu0 %1345
        %v1348 = vadd.f32 %v1340, %v1346
        %v1349 = vadd.f32 %v1341, %v1346
        %1350 = vst [vmem:[#allocation1] ss:$2 sm:$0xff] %v385
        %v1351 = vld.sshfl [vmem:[#allocation1] sm:$0xff pattern:$0x75316420]
        %v1352 = vld.sshfl [vmem:[#allocation1 + $0x8] sm:$0xff pattern:$0x75316420]
        %v1355 = vadd.f32 %v1348, %v1351
        %v1356 = vadd.f32 %v1349, %v1352
        %v1359 = vrot.slane %v1356, 4
        %vm1360 = vcmask 1043456
        %v1361 = vsel %vm1360, %v1355, %v1359
        %1363 = vst [vmem:[%s379] sm:$0xff] %v1361
        %s1364 = sand.u32 %s269, 1
        %s1365 = scalar_lea.sflag [#allocation3], %s1364
        %s1366 = sand.u32 %s269, 1
        %s1367 = smul.addr %s1366, 8
        %s1368 = scalar_lea.vmem [#allocation2], %s1367
        // Predicated region
        $region65: #{tpu_custom_call.1} parent=63 // pred_check
          %p1369 = pneg %p279
        $region66: #{tpu_custom_call.1} parent=63 // pred_check_branch
          %1371 = sbr.rel (%p1369) target = $region68
        $region67: #{tpu_custom_call.1} parent=63 // pred_region
          %1373 = vsyncadd %s1365, 0
          %s1374 = smul.addr %s25, 2
          %s1375 = smul.addr %s1374, 4
          %s1376 = scalar_lea.hbm %s11, %s1375
          %s1378 = sshll.u32 %s1368, 4
          %s1379 = int_to_ptr.vmem [resolvable:$true] %s1378
          %s1380 = sshll.u32 %s1376, 4
          %s1381 = int_to_ptr.hbm [resolvable:$true] %s1380
          %1383 = dma.vmem_to_hbm [thread:$0]  %s1379, 128, %s1381, %s1365
        $region68: #{tpu_custom_call.1} parent=63 // pred_fallthru
          _
      $region64: #{tpu_custom_call.1} parent=5 // pred_fallthru
        _
      %p1384 = scmp.le.s32.totalorder 2, %s20
      // Predicated region
      $region69: #{tpu_custom_call.1} parent=5 // pred_check
        %p1385 = pneg %p1384
      $region70: #{tpu_custom_call.1} parent=5 // pred_check_branch
        %1387 = sbr.rel (%p1385) target = $region72
      $region71: #{tpu_custom_call.1} parent=5 // pred_region
        %s1388 = ssub.s32 %s20, 2
        // Predicated region
        $region73: #{tpu_custom_call.1} parent=71 // pred_check
          %p1389 = pneg %p285
        $region74: #{tpu_custom_call.1} parent=71 // pred_check_branch
          %1391 = sbr.rel (%p1389) target = $region76
        $region75: #{tpu_custom_call.1} parent=71 // pred_region
          %s1392 = sand.u32 %s270, 1
          %s1393 = scalar_lea.sflag [#allocation3], %s1392
          %s1394 = sand.u32 %s270, 1
          %s1395 = smul.addr %s1394, 8
          %s1396 = scalar_lea.vmem [#allocation2], %s1395
          %1398 = dma.done %s1393, 128
        $region76: #{tpu_custom_call.1} parent=71 // pred_fallthru
          _
      $region72: #{tpu_custom_call.1} parent=5 // pred_fallthru
        _
    $region6: #{tpu_custom_call.1} parent=1 // loop_footer
      %s24 = sadd.s32 1, %s20
    $region7: #{tpu_custom_call.1} parent=1 // loop_footer_branch
      %19 = sbr.rel target = $region3
    $region8: #{tpu_custom_call.1} parent=1 // loop_exit
      _
    %1399 = vsyncpa [#allocation3], 1
    %s1400 = scalar_lea.sflag [#allocation3], 1
    %1401 = vsyncpa %s1400, 1

</llo_original>
